<compile_context>
chip_gen: v7x
topology: tpu7x:2x2x1
jax: 0.10.0
libtpu: 0.0.40
codegen_flags: <defaults>
</compile_context>

<pallas_src>
import functools

import jax
import jax.numpy as jnp
from jax.experimental import pallas as pl
from jax.experimental.pallas import tpu as pltpu


def _round_up(n, m):
    return (n + m - 1) // m * m


def _vmem_capacity_bytes():
    """Physical VMEM per core; conservative fallback (v7x per-TC) if unknown."""
    try:
        info = pltpu.get_tpu_info()
        cap = getattr(info, "vmem_capacity_bytes", None)
        if cap:
            return int(cap)
    except Exception:
        pass
    return 64 * 1024 * 1024


def _lstm_chunk_kernel(x_ref, wih_ref, whh_ref, bias_ref, out_ref, cn_ref,
                       gx_sc, h_sc, c_sc, *,
                       time_chunk, batch_block, hidden_pad, seq_len,
                       needs_mask, unroll):
    """One grid step == one (batch_block, time_chunk) tile.

    x_ref  : (tc*Bb, Ep)  compute-dtype chunk of the input, rows = (t, batch)
    wih_ref: (Ep, 4*Hp)   resident input weight (transposed, gate-blocked)
    whh_ref: (Hp, 4*Hp)   resident recurrent weight
    bias_ref: (1, 4*Hp)   folded b_ih + b_hh (f32)
    out_ref: (tc, Bb, Hp) hidden outputs for this chunk
    cn_ref : (Bb, Hp) f32 final cell state (written on the last time chunk)
    gx_sc  : (tc*Bb, 4*Hp) f32 scratch holding the chunk's input projection
    h_sc, c_sc: (Bb, Hp) f32 state, persistent across the time grid axis.
    """
    t_blk = pl.program_id(1)

    @pl.when(t_blk == 0)
    def _():
        h_sc[...] = jnp.zeros_like(h_sc)
        c_sc[...] = jnp.zeros_like(c_sc)

    tc, Bb, Hp = time_chunk, batch_block, hidden_pad

    # Fused input projection: ONE (tc*Bb, Ep) @ (Ep, 4Hp) MXU matmul per chunk,
    # f32 accumulation, bias folded in once.  Replaces the old gates_x HBM
    # round trip entirely.
    gx_sc[...] = jnp.dot(x_ref[...], wih_ref[...],
                         preferred_element_type=jnp.float32) + bias_ref[...]

    whh = whh_ref[...]      # resident recurrent weight, loaded once per chunk

    def step(i, carry):
        h_prev, c_prev = carry
        row = pl.multiple_of(i * Bb, Bb)           # sublane-aligned dynamic slice
        gates = gx_sc[pl.ds(row, Bb), :] + jnp.dot(
            h_prev.astype(whh.dtype), whh, preferred_element_type=jnp.float32)
        # Gate slices fall on 128-lane boundaries because Hp % 128 == 0.
        i_g = jax.nn.sigmoid(gates[:, 0 * Hp:1 * Hp])
        f_g = jax.nn.sigmoid(gates[:, 1 * Hp:2 * Hp])
        g_g = jnp.tanh(gates[:, 2 * Hp:3 * Hp])
        o_g = jax.nn.sigmoid(gates[:, 3 * Hp:4 * Hp])
        c_new = f_g * c_prev + i_g * g_g
        h_new = o_g * jnp.tanh(c_new)
        if needs_mask:
            # Ragged last chunk: padded timesteps must not advance the state.
            valid = (t_blk * tc + i) < seq_len
            c_new = jnp.where(valid, c_new, c_prev)
            h_new = jnp.where(valid, h_new, h_prev)
        out_ref[i] = h_new.astype(out_ref.dtype)
        return h_new, c_new

    h_fin, c_fin = jax.lax.fori_loop(0, tc, step, (h_sc[...], c_sc[...]),
                                     unroll=unroll)
    h_sc[...] = h_fin
    c_sc[...] = c_fin

    @pl.when(t_blk == pl.num_programs(1) - 1)
    def _():
        cn_ref[...] = c_sc[...].astype(cn_ref.dtype)


def lstm_forward_pallas(x, w_ih, w_hh, b_ih, b_hh, *,
                        compute_dtype=jnp.bfloat16,
                        time_chunk=32,
                        num_cores=1):
    """Single-layer LSTM forward, zero initial state.

    x:    (S, B, E) float32 (time-major, PyTorch nn.LSTM default)
    w_ih: (4H, E), w_hh: (4H, H), b_ih/b_hh: (4H,)  -- PyTorch parameter shapes.
    Returns: outputs (S, B, H) in x.dtype, (h_n, c_n) each (1, B, H) float32.
    """
    S, B, E = x.shape
    H = w_ih.shape[0] // 4

    # Lane/sublane-aligned padded sizes (unmasked lane-dense stores,
    # tile-aligned gate slices, aligned MXU operands).
    Bp = _round_up(max(B, 8), 8)
    Hp = _round_up(max(H, 128), 128)
    Ep = _round_up(max(E, 128), 128)

    # Batch blocking: one block on single-TC chips (v5e/v6e); split only when
    # the caller asks for >1 core (v7x megacore, "parallel" batch grid axis).
    if num_cores > 1 and Bp % (8 * num_cores) == 0:
        nb = num_cores
    else:
        nb = 1
    Bb = Bp // nb

    cdt = jnp.dtype(compute_dtype)
    out_dt = jnp.dtype(x.dtype)
    f32 = jnp.float32

    # ---- time chunking: ceil-divide; shrink chunk to fit the VMEM budget -----
    tc = max(1, min(int(time_chunk), S))

    def footprint(tc_):
        x_tile = tc_ * Bb * Ep * cdt.itemsize
        out_tile = tc_ * Bb * Hp * out_dt.itemsize
        gx = tc_ * Bb * 4 * Hp * 4
        wgt = (Ep + Hp) * 4 * Hp * cdt.itemsize + 4 * Hp * 4
        cn = Bb * Hp * 4
        state = 2 * Bb * Hp * 4
        # Inputs/outputs and (constant-index) weights are double-buffered by
        # the Pallas pipeline; gx/state are plain scratch.
        return 2 * (x_tile + out_tile + cn + wgt) + gx + state

    vmem_cap = _vmem_capacity_bytes()
    vmem_budget = min(int(vmem_cap * 0.70), 96 * 1024 * 1024)
    while tc > 1 and footprint(tc) > vmem_budget:
        tc = max(1, tc // 2)

    nt = pl.cdiv(S, tc)
    Sp = nt * tc
    needs_mask = Sp != S
    unroll = min(tc, 4 if Hp >= 512 else 8)
    vmem_limit = int(min(vmem_cap * 0.80,
                         max(footprint(tc) + (4 << 20), 32 << 20)))

    # ---- pad & lay out operands (only small tensors are padded) --------------
    # x: cast to the compute dtype (halves the dominant HBM read for bf16),
    # pad time to Sp, batch to Bp, emb to Ep (zeros; padded timesteps masked,
    # padded hidden columns stay exactly 0 through the recurrence).
    x_p = jnp.pad(x.astype(cdt), ((0, Sp - S), (0, Bp - B), (0, Ep - E)))
    # (Sp, Bp, Ep) -> (nb, nt, tc*Bb, Ep): each chunk is a 2-D slab whose rows
    # iterate (time-in-chunk, batch) -- ready for a single MXU matmul, no
    # in-kernel reshape needed.
    x_rows = (x_p.reshape(Sp, nb, Bb, Ep).transpose(1, 0, 2, 3)
                 .reshape(nb, nt, tc * Bb, Ep))

    # Weights: transposed, gate-blocked, padded (pad the small weights instead
    # of any big activation tensor), cast to the compute dtype.
    wih_t = jnp.asarray(w_ih, f32).T.reshape(E, 4, H)
    wih_p = jnp.pad(wih_t, ((0, Ep - E), (0, 0), (0, Hp - H)))
    wih_p = wih_p.reshape(Ep, 4 * Hp).astype(cdt)

    whh_t = jnp.asarray(w_hh, f32).T.reshape(H, 4, H)
    whh_p = jnp.pad(whh_t, ((0, Hp - H), (0, 0), (0, Hp - H)))
    whh_p = whh_p.reshape(Hp, 4 * Hp).astype(cdt)

    bias = (jnp.asarray(b_ih, f32) + jnp.asarray(b_hh, f32)).reshape(4, H)
    bias_p = jnp.pad(bias, ((0, 0), (0, Hp - H))).reshape(1, 4 * Hp)

    kernel = functools.partial(
        _lstm_chunk_kernel, time_chunk=tc, batch_block=Bb, hidden_pad=Hp,
        seq_len=S, needs_mask=needs_mask, unroll=unroll)

    out_p, c_n_p = pl.pallas_call(
        kernel,
        out_shape=(
            jax.ShapeDtypeStruct((nb, Sp, Bb, Hp), out_dt),
            jax.ShapeDtypeStruct((nb, Bb, Hp), f32),
        ),
        grid_spec=pltpu.PrefetchScalarGridSpec(
            num_scalar_prefetch=0,
            grid=(nb, nt),
            in_specs=[
                # Per-chunk input slab (tc*Bb, Ep).
                pl.BlockSpec((None, None, tc * Bb, Ep),
                             lambda b, t: (b, t, 0, 0)),
                # Resident weights / bias (constant index maps).
                # TODO(synk): pipeline_mode=pl.Buffered(1) would drop their
                #             second pipeline buffer; left at defaults for
                #             portable lowering.
                pl.BlockSpec((Ep, 4 * Hp), lambda b, t: (0, 0)),
                pl.BlockSpec((Hp, 4 * Hp), lambda b, t: (0, 0)),
                pl.BlockSpec((1, 4 * Hp), lambda b, t: (0, 0)),
            ],
            out_specs=(
                pl.BlockSpec((None, tc, Bb, Hp), lambda b, t: (b, t, 0, 0)),
                pl.BlockSpec((None, Bb, Hp), lambda b, t: (b, 0, 0)),
            ),
            scratch_shapes=[
                pltpu.VMEM((tc * Bb, 4 * Hp), f32),   # chunk input-gate buffer
                pltpu.VMEM((Bb, Hp), f32),            # h state
                pltpu.VMEM((Bb, Hp), f32),            # c state
            ],
        ),
        compiler_params=pltpu.CompilerParams(
            dimension_semantics=("parallel", "arbitrary"),
            vmem_limit_bytes=vmem_limit,
        ),
    )(x_rows, wih_p, whh_p, bias_p)

    out = out_p.transpose(1, 0, 2, 3).reshape(Sp, Bp, Hp)[:S, :B, :H]
    h_n = out[S - 1:S].astype(f32)                    # (1, B, H)
    c_n = c_n_p.reshape(Bp, Hp)[:B, :H][None].astype(f32)   # (1, B, H)
    return out, (h_n, c_n)


class BaseRNNPallas:
    """JAX/Pallas mirror of BaseRNN.__init__ (rnn_cell_name='lstm' supported)."""

    def __init__(self, vocab_size, emb_size, hidden_size, input_dropout_p,
                 dropout_p, n_layers, rnn_cell_name, key,
                 compute_dtype=jnp.bfloat16):
        if rnn_cell_name.lower() == "lstm":
            pass
        elif rnn_cell_name.lower() == "gru":
            # TODO(synk): GRU gate math not implemented; LSTM path only.
            raise NotImplementedError("Only the LSTM cell is implemented in Pallas")
        else:
            raise ValueError("Unsupported RNN Cell: {0}".format(rnn_cell_name))
        self.vocab_size = vocab_size
        self.emb_size = emb_size
        self.hidden_size = hidden_size
        self.n_layers = n_layers
        self.input_dropout_p = input_dropout_p
        self.dropout_p = dropout_p
        self.rnn_cell_name = rnn_cell_name
        self.compute_dtype = compute_dtype

        # Deterministic parameter init, PyTorch-style uniform(-1/sqrt(H), 1/sqrt(H)).
        k = 1.0 / jnp.sqrt(jnp.float32(hidden_size))
        k1, k2, k3, k4 = jax.random.split(key, 4)
        self.w_ih = jax.random.uniform(k1, (4 * hidden_size, emb_size), jnp.float32, -k, k)
        self.w_hh = jax.random.uniform(k2, (4 * hidden_size, hidden_size), jnp.float32, -k, k)
        self.b_ih = jax.random.uniform(k3, (4 * hidden_size,), jnp.float32, -k, k)
        self.b_hh = jax.random.uniform(k4, (4 * hidden_size,), jnp.float32, -k, k)

    def __call__(self, x):
        # input dropout: eval mode => identity (nn.Dropout(p).eval() is a no-op).
        return lstm_forward_pallas(
            x, self.w_ih, self.w_hh, self.b_ih, self.b_hh,
            compute_dtype=self.compute_dtype)


def _lstm_reference(x, w_ih, w_hh, b_ih, b_hh):
    """Pure-JAX reference (lax.scan) with PyTorch gate ordering."""
    S, B, E = x.shape
    H = w_ih.shape[0] // 4
    bias = b_ih + b_hh

    def step(carry, x_t):
        h, c = carry
        gates = x_t @ w_ih.T + h @ w_hh.T + bias
        i = jax.nn.sigmoid(gates[:, 0 * H:1 * H])
        f = jax.nn.sigmoid(gates[:, 1 * H:2 * H])
        g = jnp.tanh(gates[:, 2 * H:3 * H])
        o = jax.nn.sigmoid(gates[:, 3 * H:4 * H])
        c = f * c + i * g
        h = o * jnp.tanh(c)
        return (h, c), h

    init = (jnp.zeros((B, H), jnp.float32), jnp.zeros((B, H), jnp.float32))
    (h_n, c_n), outs = jax.lax.scan(step, init, x)
    return outs, (h_n, c_n)


if __name__ == "__main__":
    # Small shapes consistent with the module's __init__ arguments.
    vocab_size = 100
    emb_size = 32
    hidden_size = 32
    n_layers = 1
    seq_len = 8
    batch = 2

    key = jax.random.PRNGKey(0)
    k_param, k_x = jax.random.split(key)

    model = BaseRNNPallas(
        vocab_size=vocab_size,
        emb_size=emb_size,
        hidden_size=hidden_size,
        input_dropout_p=0.1,
        dropout_p=0.1,
        n_layers=n_layers,
        rnn_cell_name="lstm",
        key=k_param,
    )

    # x layout: (seq_len, batch, emb_size) — PyTorch nn.LSTM default (batch_first=False).
    x = jax.random.normal(k_x, (seq_len, batch, emb_size), dtype=jnp.float32)

    ref_out, (ref_h, ref_c) = _lstm_reference(
        x, model.w_ih, model.w_hh, model.b_ih, model.b_hh)

    # 1) f32 matmul path: tight tolerance vs the pure-JAX reference.
    out32, (h32, c32) = lstm_forward_pallas(
        x, model.w_ih, model.w_hh, model.b_ih, model.b_hh,
        compute_dtype=jnp.float32)
    out32 = jax.block_until_ready(out32)
    assert out32.shape == (seq_len, batch, hidden_size)
    assert jnp.allclose(out32, ref_out, atol=2e-4, rtol=2e-4), "f32 Pallas LSTM mismatch"
    assert jnp.allclose(h32[0], ref_h, atol=2e-4, rtol=2e-4), "f32 h_n mismatch"
    assert jnp.allclose(c32[0], ref_c, atol=2e-4, rtol=2e-4), "f32 c_n mismatch"

    # 2) ragged time chunk (tc=5 does not divide S=8) exercises the masked path.
    out_rg, (h_rg, c_rg) = lstm_forward_pallas(
        x, model.w_ih, model.w_hh, model.b_ih, model.b_hh,
        compute_dtype=jnp.float32, time_chunk=5)
    out_rg = jax.block_until_ready(out_rg)
    assert out_rg.shape == (seq_len, batch, hidden_size)
    assert jnp.allclose(out_rg, ref_out, atol=2e-4, rtol=2e-4), "ragged-chunk LSTM mismatch"
    assert jnp.allclose(h_rg[0], ref_h, atol=2e-4, rtol=2e-4), "ragged h_n mismatch"
    assert jnp.allclose(c_rg[0], ref_c, atol=2e-4, rtol=2e-4), "ragged c_n mismatch"

    # 3) default perf path (bf16 MXU operands, f32 accumulation): loose tolerance.
    out_bf, (h_bf, c_bf) = model(x)
    out_bf = jax.block_until_ready(out_bf)
    assert out_bf.shape == (seq_len, batch, hidden_size)
    assert jnp.allclose(out_bf, ref_out, atol=3e-2, rtol=3e-2), "bf16 Pallas LSTM mismatch"
    assert jnp.allclose(h_bf[0], ref_h, atol=3e-2, rtol=3e-2), "bf16 h_n mismatch"
    assert jnp.allclose(c_bf[0], ref_c, atol=3e-2, rtol=3e-2), "bf16 c_n mismatch"

    print("KERNEL_OK")
</pallas_src>

<mosaic_0001>
module attributes {stable_mosaic.version = 11 : i64} {
  func.func @_lstm_chunk_kernel(%arg0: i32, %arg1: i32, %arg2: memref<1x1x64x128xf32, #tpu.memory_space<vmem>>, %arg3: memref<128x512xf32, #tpu.memory_space<vmem>>, %arg4: memref<128x512xf32, #tpu.memory_space<vmem>>, %arg5: memref<1x512xf32, #tpu.memory_space<vmem>>, %arg6: memref<1x8x8x128xf32, #tpu.memory_space<vmem>>, %arg7: memref<1x8x128xf32, #tpu.memory_space<vmem>>, %arg8: memref<64x512xf32, #tpu.memory_space<vmem>>, %arg9: memref<8x128xf32, #tpu.memory_space<vmem>>, %arg10: memref<8x128xf32, #tpu.memory_space<vmem>>) attributes {dimension_semantics = [#tpu.dimension_semantics<parallel>, #tpu.dimension_semantics<arbitrary>], iteration_bounds = array<i64: 1, 1>, scalar_prefetch = 0 : i64, scratch_operands = 3 : i64, tpu.core_type = #tpu.core_type<tc>, window_params = [{transform_indices = @transform_0, window_bounds = array<i64: 1, 1, 64, 128>}, {pipeline_mode = #tpu.pipeline_mode<synchronous>, transform_indices = @transform_1, window_bounds = array<i64: 128, 512>}, {pipeline_mode = #tpu.pipeline_mode<synchronous>, transform_indices = @transform_2, window_bounds = array<i64: 128, 512>}, {pipeline_mode = #tpu.pipeline_mode<synchronous>, transform_indices = @transform_3, window_bounds = array<i64: 1, 512>}, {transform_indices = @transform_4, window_bounds = array<i64: 1, 8, 8, 128>}, {transform_indices = @transform_5, window_bounds = array<i64: 1, 8, 128>}]} {
    %c0_i32 = arith.constant 0 : i32
    %0 = arith.cmpi eq, %arg1, %c0_i32 : i32
    %1 = arith.extui %0 : i1 to i32
    %c0_i32_0 = arith.constant 0 : i32
    %2 = arith.cmpi ne, %1, %c0_i32_0 : i32
    scf.if %2 {
      %cst_95 = arith.constant 0.000000e+00 : f32
      %299 = vector.broadcast %cst_95 : f32 to vector<8x128xf32>
      %c0_96 = arith.constant 0 : index
      %c0_97 = arith.constant 0 : index
      %300 = vector.load %arg9[%c0_96, %c0_97] : memref<8x128xf32, #tpu.memory_space<vmem>>, vector<8x128xf32>
      tpu.vector_store %arg9[%c0_96, %c0_97], %299 {strides = array<i32>} : memref<8x128xf32, #tpu.memory_space<vmem>>, vector<8x128xf32>,
      %cst_98 = arith.constant 0.000000e+00 : f32
      %301 = vector.broadcast %cst_98 : f32 to vector<8x128xf32>
      %c0_99 = arith.constant 0 : index
      %c0_100 = arith.constant 0 : index
      %302 = vector.load %arg10[%c0_99, %c0_100] : memref<8x128xf32, #tpu.memory_space<vmem>>, vector<8x128xf32>
      tpu.vector_store %arg10[%c0_99, %c0_100], %301 {strides = array<i32>} : memref<8x128xf32, #tpu.memory_space<vmem>>, vector<8x128xf32>,
    } else {
    }
    %c0 = arith.constant 0 : index
    %c0_1 = arith.constant 0 : index
    %c0_2 = arith.constant 0 : index
    %c0_3 = arith.constant 0 : index
    %3 = vector.load %arg2[%c0, %c0_1, %c0_2, %c0_3] : memref<1x1x64x128xf32, #tpu.memory_space<vmem>>, vector<1x1x64x128xf32>
    %4 = vector.shape_cast %3 : vector<1x1x64x128xf32> to vector<64x128xf32>
    %c0_4 = arith.constant 0 : index
    %c0_5 = arith.constant 0 : index
    %5 = vector.load %arg3[%c0_4, %c0_5] : memref<128x512xf32, #tpu.memory_space<vmem>>, vector<128x512xf32>
    %cst = arith.constant dense<0.000000e+00> : vector<64x512xf32>
    %6 = tpu.matmul %4, %5, %cst {dimension_numbers = #tpu.dot_dimension_numbers<[1], [0], [0], [1], [0, 0, 1, 1], [], []>} : vector<64x128xf32>, vector<128x512xf32>, vector<64x512xf32> -> vector<64x512xf32>
    %c0_6 = arith.constant 0 : index
    %c0_7 = arith.constant 0 : index
    %7 = vector.load %arg5[%c0_6, %c0_7] : memref<1x512xf32, #tpu.memory_space<vmem>>, vector<1x512xf32>
    %8 = vector.broadcast %7 : vector<1x512xf32> to vector<64x512xf32>
    %9 = arith.addf %6, %8 : vector<64x512xf32>
    %c0_8 = arith.constant 0 : index
    %c0_9 = arith.constant 0 : index
    %10 = vector.load %arg8[%c0_8, %c0_9] : memref<64x512xf32, #tpu.memory_space<vmem>>, vector<64x512xf32>
    tpu.vector_store %arg8[%c0_8, %c0_9], %9 {strides = array<i32>} : memref<64x512xf32, #tpu.memory_space<vmem>>, vector<64x512xf32>,
    %c0_10 = arith.constant 0 : index
    %c0_11 = arith.constant 0 : index
    %11 = vector.load %arg4[%c0_10, %c0_11] : memref<128x512xf32, #tpu.memory_space<vmem>>, vector<128x512xf32>
    %c0_12 = arith.constant 0 : index
    %c0_13 = arith.constant 0 : index
    %12 = vector.load %arg9[%c0_12, %c0_13] : memref<8x128xf32, #tpu.memory_space<vmem>>, vector<8x128xf32>
    %c0_14 = arith.constant 0 : index
    %c0_15 = arith.constant 0 : index
    %13 = vector.load %arg10[%c0_14, %c0_15] : memref<8x128xf32, #tpu.memory_space<vmem>>, vector<8x128xf32>
    %c0_i32_16 = arith.constant 0 : i32
    %c8_i32 = arith.constant 8 : i32
    %14 = arith.muli %c0_i32_16, %c8_i32 : i32
    %15 = tpu.assume_multiple %14, 8 : i32
    %16 = arith.index_cast %15 : i32 to index
    %c0_17 = arith.constant 0 : index
    %17 = vector.load %arg8[%16, %c0_17] : memref<64x512xf32, #tpu.memory_space<vmem>>, vector<8x512xf32>
    %cst_18 = arith.constant dense<0.000000e+00> : vector<8x512xf32>
    %18 = tpu.matmul %12, %11, %cst_18 {dimension_numbers = #tpu.dot_dimension_numbers<[1], [0], [0], [1], [0, 0, 1, 1], [], []>} : vector<8x128xf32>, vector<128x512xf32>, vector<8x512xf32> -> vector<8x512xf32>
    %19 = arith.addf %17, %18 : vector<8x512xf32>
    %20 = vector.extract_strided_slice %19 {offsets = [0, 0], sizes = [8, 128], strides = [1, 1]} : vector<8x512xf32> to vector<8x128xf32>
    %21 = arith.negf %20 : vector<8x128xf32>
    %22 = math.exp %21 : vector<8x128xf32>
    %cst_19 = arith.constant 1.000000e+00 : f32
    %23 = vector.broadcast %cst_19 : f32 to vector<8x128xf32>
    %24 = arith.addf %23, %22 : vector<8x128xf32>
    %25 = arith.divf %23, %24 : vector<8x128xf32>
    %26 = vector.extract_strided_slice %19 {offsets = [0, 128], sizes = [8, 128], strides = [1, 1]} : vector<8x512xf32> to vector<8x128xf32>
    %27 = arith.negf %26 : vector<8x128xf32>
    %28 = math.exp %27 : vector<8x128xf32>
    %cst_20 = arith.constant 1.000000e+00 : f32
    %29 = vector.broadcast %cst_20 : f32 to vector<8x128xf32>
    %30 = arith.addf %29, %28 : vector<8x128xf32>
    %31 = arith.divf %29, %30 : vector<8x128xf32>
    %32 = vector.extract_strided_slice %19 {offsets = [0, 256], sizes = [8, 128], strides = [1, 1]} : vector<8x512xf32> to vector<8x128xf32>
    %33 = math.tanh %32 : vector<8x128xf32>
    %34 = vector.extract_strided_slice %19 {offsets = [0, 384], sizes = [8, 128], strides = [1, 1]} : vector<8x512xf32> to vector<8x128xf32>
    %35 = arith.negf %34 : vector<8x128xf32>
    %36 = math.exp %35 : vector<8x128xf32>
    %cst_21 = arith.constant 1.000000e+00 : f32
    %37 = vector.broadcast %cst_21 : f32 to vector<8x128xf32>
    %38 = arith.addf %37, %36 : vector<8x128xf32>
    %39 = arith.divf %37, %38 : vector<8x128xf32>
    %40 = arith.mulf %31, %13 : vector<8x128xf32>
    %41 = arith.mulf %25, %33 : vector<8x128xf32>
    %42 = arith.addf %40, %41 : vector<8x128xf32>
    %43 = math.tanh %42 : vector<8x128xf32>
    %44 = arith.mulf %39, %43 : vector<8x128xf32>
    %c0_22 = arith.constant 0 : index
    %45 = arith.index_cast %c0_i32_16 : i32 to index
    %c0_23 = arith.constant 0 : index
    %c0_24 = arith.constant 0 : index
    %46 = vector.load %arg6[%c0_22, %45, %c0_23, %c0_24] : memref<1x8x8x128xf32, #tpu.memory_space<vmem>>, vector<1x1x8x128xf32>
    %47 = vector.shape_cast %46 : vector<1x1x8x128xf32> to vector<8x128xf32>
    %48 = vector.shape_cast %44 : vector<8x128xf32> to vector<1x1x8x128xf32>
    tpu.vector_store %arg6[%c0_22, %45, %c0_23, %c0_24], %48 {strides = array<i32>} : memref<1x8x8x128xf32, #tpu.memory_space<vmem>>, vector<1x1x8x128xf32>,
    %c1_i32 = arith.constant 1 : i32
    %c8_i32_25 = arith.constant 8 : i32
    %49 = arith.muli %c1_i32, %c8_i32_25 : i32
    %50 = tpu.assume_multiple %49, 8 : i32
    %51 = arith.index_cast %50 : i32 to index
    %c0_26 = arith.constant 0 : index
    %52 = vector.load %arg8[%51, %c0_26] : memref<64x512xf32, #tpu.memory_space<vmem>>, vector<8x512xf32>
    %cst_27 = arith.constant dense<0.000000e+00> : vector<8x512xf32>
    %53 = tpu.matmul %44, %11, %cst_27 {dimension_numbers = #tpu.dot_dimension_numbers<[1], [0], [0], [1], [0, 0, 1, 1], [], []>} : vector<8x128xf32>, vector<128x512xf32>, vector<8x512xf32> -> vector<8x512xf32>
    %54 = arith.addf %52, %53 : vector<8x512xf32>
    %55 = vector.extract_strided_slice %54 {offsets = [0, 0], sizes = [8, 128], strides = [1, 1]} : vector<8x512xf32> to vector<8x128xf32>
    %56 = arith.negf %55 : vector<8x128xf32>
    %57 = math.exp %56 : vector<8x128xf32>
    %cst_28 = arith.constant 1.000000e+00 : f32
    %58 = vector.broadcast %cst_28 : f32 to vector<8x128xf32>
    %59 = arith.addf %58, %57 : vector<8x128xf32>
    %60 = arith.divf %58, %59 : vector<8x128xf32>
    %61 = vector.extract_strided_slice %54 {offsets = [0, 128], sizes = [8, 128], strides = [1, 1]} : vector<8x512xf32> to vector<8x128xf32>
    %62 = arith.negf %61 : vector<8x128xf32>
    %63 = math.exp %62 : vector<8x128xf32>
    %cst_29 = arith.constant 1.000000e+00 : f32
    %64 = vector.broadcast %cst_29 : f32 to vector<8x128xf32>
    %65 = arith.addf %64, %63 : vector<8x128xf32>
    %66 = arith.divf %64, %65 : vector<8x128xf32>
    %67 = vector.extract_strided_slice %54 {offsets = [0, 256], sizes = [8, 128], strides = [1, 1]} : vector<8x512xf32> to vector<8x128xf32>
    %68 = math.tanh %67 : vector<8x128xf32>
    %69 = vector.extract_strided_slice %54 {offsets = [0, 384], sizes = [8, 128], strides = [1, 1]} : vector<8x512xf32> to vector<8x128xf32>
    %70 = arith.negf %69 : vector<8x128xf32>
    %71 = math.exp %70 : vector<8x128xf32>
    %cst_30 = arith.constant 1.000000e+00 : f32
    %72 = vector.broadcast %cst_30 : f32 to vector<8x128xf32>
    %73 = arith.addf %72, %71 : vector<8x128xf32>
    %74 = arith.divf %72, %73 : vector<8x128xf32>
    %75 = arith.mulf %66, %42 : vector<8x128xf32>
    %76 = arith.mulf %60, %68 : vector<8x128xf32>
    %77 = arith.addf %75, %76 : vector<8x128xf32>
    %78 = math.tanh %77 : vector<8x128xf32>
    %79 = arith.mulf %74, %78 : vector<8x128xf32>
    %c0_31 = arith.constant 0 : index
    %80 = arith.index_cast %c1_i32 : i32 to index
    %c0_32 = arith.constant 0 : index
    %c0_33 = arith.constant 0 : index
    %81 = vector.load %arg6[%c0_31, %80, %c0_32, %c0_33] : memref<1x8x8x128xf32, #tpu.memory_space<vmem>>, vector<1x1x8x128xf32>
    %82 = vector.shape_cast %81 : vector<1x1x8x128xf32> to vector<8x128xf32>
    %83 = vector.shape_cast %79 : vector<8x128xf32> to vector<1x1x8x128xf32>
    tpu.vector_store %arg6[%c0_31, %80, %c0_32, %c0_33], %83 {strides = array<i32>} : memref<1x8x8x128xf32, #tpu.memory_space<vmem>>, vector<1x1x8x128xf32>,
    %c2_i32 = arith.constant 2 : i32
    %c8_i32_34 = arith.constant 8 : i32
    %84 = arith.muli %c2_i32, %c8_i32_34 : i32
    %85 = tpu.assume_multiple %84, 8 : i32
    %86 = arith.index_cast %85 : i32 to index
    %c0_35 = arith.constant 0 : index
    %87 = vector.load %arg8[%86, %c0_35] : memref<64x512xf32, #tpu.memory_space<vmem>>, vector<8x512xf32>
    %cst_36 = arith.constant dense<0.000000e+00> : vector<8x512xf32>
    %88 = tpu.matmul %79, %11, %cst_36 {dimension_numbers = #tpu.dot_dimension_numbers<[1], [0], [0], [1], [0, 0, 1, 1], [], []>} : vector<8x128xf32>, vector<128x512xf32>, vector<8x512xf32> -> vector<8x512xf32>
    %89 = arith.addf %87, %88 : vector<8x512xf32>
    %90 = vector.extract_strided_slice %89 {offsets = [0, 0], sizes = [8, 128], strides = [1, 1]} : vector<8x512xf32> to vector<8x128xf32>
    %91 = arith.negf %90 : vector<8x128xf32>
    %92 = math.exp %91 : vector<8x128xf32>
    %cst_37 = arith.constant 1.000000e+00 : f32
    %93 = vector.broadcast %cst_37 : f32 to vector<8x128xf32>
    %94 = arith.addf %93, %92 : vector<8x128xf32>
    %95 = arith.divf %93, %94 : vector<8x128xf32>
    %96 = vector.extract_strided_slice %89 {offsets = [0, 128], sizes = [8, 128], strides = [1, 1]} : vector<8x512xf32> to vector<8x128xf32>
    %97 = arith.negf %96 : vector<8x128xf32>
    %98 = math.exp %97 : vector<8x128xf32>
    %cst_38 = arith.constant 1.000000e+00 : f32
    %99 = vector.broadcast %cst_38 : f32 to vector<8x128xf32>
    %100 = arith.addf %99, %98 : vector<8x128xf32>
    %101 = arith.divf %99, %100 : vector<8x128xf32>
    %102 = vector.extract_strided_slice %89 {offsets = [0, 256], sizes = [8, 128], strides = [1, 1]} : vector<8x512xf32> to vector<8x128xf32>
    %103 = math.tanh %102 : vector<8x128xf32>
    %104 = vector.extract_strided_slice %89 {offsets = [0, 384], sizes = [8, 128], strides = [1, 1]} : vector<8x512xf32> to vector<8x128xf32>
    %105 = arith.negf %104 : vector<8x128xf32>
    %106 = math.exp %105 : vector<8x128xf32>
    %cst_39 = arith.constant 1.000000e+00 : f32
    %107 = vector.broadcast %cst_39 : f32 to vector<8x128xf32>
    %108 = arith.addf %107, %106 : vector<8x128xf32>
    %109 = arith.divf %107, %108 : vector<8x128xf32>
    %110 = arith.mulf %101, %77 : vector<8x128xf32>
    %111 = arith.mulf %95, %103 : vector<8x128xf32>
    %112 = arith.addf %110, %111 : vector<8x128xf32>
    %113 = math.tanh %112 : vector<8x128xf32>
    %114 = arith.mulf %109, %113 : vector<8x128xf32>
    %c0_40 = arith.constant 0 : index
    %115 = arith.index_cast %c2_i32 : i32 to index
    %c0_41 = arith.constant 0 : index
    %c0_42 = arith.constant 0 : index
    %116 = vector.load %arg6[%c0_40, %115, %c0_41, %c0_42] : memref<1x8x8x128xf32, #tpu.memory_space<vmem>>, vector<1x1x8x128xf32>
    %117 = vector.shape_cast %116 : vector<1x1x8x128xf32> to vector<8x128xf32>
    %118 = vector.shape_cast %114 : vector<8x128xf32> to vector<1x1x8x128xf32>
    tpu.vector_store %arg6[%c0_40, %115, %c0_41, %c0_42], %118 {strides = array<i32>} : memref<1x8x8x128xf32, #tpu.memory_space<vmem>>, vector<1x1x8x128xf32>,
    %c3_i32 = arith.constant 3 : i32
    %c8_i32_43 = arith.constant 8 : i32
    %119 = arith.muli %c3_i32, %c8_i32_43 : i32
    %120 = tpu.assume_multiple %119, 8 : i32
    %121 = arith.index_cast %120 : i32 to index
    %c0_44 = arith.constant 0 : index
    %122 = vector.load %arg8[%121, %c0_44] : memref<64x512xf32, #tpu.memory_space<vmem>>, vector<8x512xf32>
    %cst_45 = arith.constant dense<0.000000e+00> : vector<8x512xf32>
    %123 = tpu.matmul %114, %11, %cst_45 {dimension_numbers = #tpu.dot_dimension_numbers<[1], [0], [0], [1], [0, 0, 1, 1], [], []>} : vector<8x128xf32>, vector<128x512xf32>, vector<8x512xf32> -> vector<8x512xf32>
    %124 = arith.addf %122, %123 : vector<8x512xf32>
    %125 = vector.extract_strided_slice %124 {offsets = [0, 0], sizes = [8, 128], strides = [1, 1]} : vector<8x512xf32> to vector<8x128xf32>
    %126 = arith.negf %125 : vector<8x128xf32>
    %127 = math.exp %126 : vector<8x128xf32>
    %cst_46 = arith.constant 1.000000e+00 : f32
    %128 = vector.broadcast %cst_46 : f32 to vector<8x128xf32>
    %129 = arith.addf %128, %127 : vector<8x128xf32>
    %130 = arith.divf %128, %129 : vector<8x128xf32>
    %131 = vector.extract_strided_slice %124 {offsets = [0, 128], sizes = [8, 128], strides = [1, 1]} : vector<8x512xf32> to vector<8x128xf32>
    %132 = arith.negf %131 : vector<8x128xf32>
    %133 = math.exp %132 : vector<8x128xf32>
    %cst_47 = arith.constant 1.000000e+00 : f32
    %134 = vector.broadcast %cst_47 : f32 to vector<8x128xf32>
    %135 = arith.addf %134, %133 : vector<8x128xf32>
    %136 = arith.divf %134, %135 : vector<8x128xf32>
    %137 = vector.extract_strided_slice %124 {offsets = [0, 256], sizes = [8, 128], strides = [1, 1]} : vector<8x512xf32> to vector<8x128xf32>
    %138 = math.tanh %137 : vector<8x128xf32>
    %139 = vector.extract_strided_slice %124 {offsets = [0, 384], sizes = [8, 128], strides = [1, 1]} : vector<8x512xf32> to vector<8x128xf32>
    %140 = arith.negf %139 : vector<8x128xf32>
    %141 = math.exp %140 : vector<8x128xf32>
    %cst_48 = arith.constant 1.000000e+00 : f32
    %142 = vector.broadcast %cst_48 : f32 to vector<8x128xf32>
    %143 = arith.addf %142, %141 : vector<8x128xf32>
    %144 = arith.divf %142, %143 : vector<8x128xf32>
    %145 = arith.mulf %136, %112 : vector<8x128xf32>
    %146 = arith.mulf %130, %138 : vector<8x128xf32>
    %147 = arith.addf %145, %146 : vector<8x128xf32>
    %148 = math.tanh %147 : vector<8x128xf32>
    %149 = arith.mulf %144, %148 : vector<8x128xf32>
    %c0_49 = arith.constant 0 : index
    %150 = arith.index_cast %c3_i32 : i32 to index
    %c0_50 = arith.constant 0 : index
    %c0_51 = arith.constant 0 : index
    %151 = vector.load %arg6[%c0_49, %150, %c0_50, %c0_51] : memref<1x8x8x128xf32, #tpu.memory_space<vmem>>, vector<1x1x8x128xf32>
    %152 = vector.shape_cast %151 : vector<1x1x8x128xf32> to vector<8x128xf32>
    %153 = vector.shape_cast %149 : vector<8x128xf32> to vector<1x1x8x128xf32>
    tpu.vector_store %arg6[%c0_49, %150, %c0_50, %c0_51], %153 {strides = array<i32>} : memref<1x8x8x128xf32, #tpu.memory_space<vmem>>, vector<1x1x8x128xf32>,
    %c4_i32 = arith.constant 4 : i32
    %c8_i32_52 = arith.constant 8 : i32
    %154 = arith.muli %c4_i32, %c8_i32_52 : i32
    %155 = tpu.assume_multiple %154, 8 : i32
    %156 = arith.index_cast %155 : i32 to index
    %c0_53 = arith.constant 0 : index
    %157 = vector.load %arg8[%156, %c0_53] : memref<64x512xf32, #tpu.memory_space<vmem>>, vector<8x512xf32>
    %cst_54 = arith.constant dense<0.000000e+00> : vector<8x512xf32>
    %158 = tpu.matmul %149, %11, %cst_54 {dimension_numbers = #tpu.dot_dimension_numbers<[1], [0], [0], [1], [0, 0, 1, 1], [], []>} : vector<8x128xf32>, vector<128x512xf32>, vector<8x512xf32> -> vector<8x512xf32>
    %159 = arith.addf %157, %158 : vector<8x512xf32>
    %160 = vector.extract_strided_slice %159 {offsets = [0, 0], sizes = [8, 128], strides = [1, 1]} : vector<8x512xf32> to vector<8x128xf32>
    %161 = arith.negf %160 : vector<8x128xf32>
    %162 = math.exp %161 : vector<8x128xf32>
    %cst_55 = arith.constant 1.000000e+00 : f32
    %163 = vector.broadcast %cst_55 : f32 to vector<8x128xf32>
    %164 = arith.addf %163, %162 : vector<8x128xf32>
    %165 = arith.divf %163, %164 : vector<8x128xf32>
    %166 = vector.extract_strided_slice %159 {offsets = [0, 128], sizes = [8, 128], strides = [1, 1]} : vector<8x512xf32> to vector<8x128xf32>
    %167 = arith.negf %166 : vector<8x128xf32>
    %168 = math.exp %167 : vector<8x128xf32>
    %cst_56 = arith.constant 1.000000e+00 : f32
    %169 = vector.broadcast %cst_56 : f32 to vector<8x128xf32>
    %170 = arith.addf %169, %168 : vector<8x128xf32>
    %171 = arith.divf %169, %170 : vector<8x128xf32>
    %172 = vector.extract_strided_slice %159 {offsets = [0, 256], sizes = [8, 128], strides = [1, 1]} : vector<8x512xf32> to vector<8x128xf32>
    %173 = math.tanh %172 : vector<8x128xf32>
    %174 = vector.extract_strided_slice %159 {offsets = [0, 384], sizes = [8, 128], strides = [1, 1]} : vector<8x512xf32> to vector<8x128xf32>
    %175 = arith.negf %174 : vector<8x128xf32>
    %176 = math.exp %175 : vector<8x128xf32>
    %cst_57 = arith.constant 1.000000e+00 : f32
    %177 = vector.broadcast %cst_57 : f32 to vector<8x128xf32>
    %178 = arith.addf %177, %176 : vector<8x128xf32>
    %179 = arith.divf %177, %178 : vector<8x128xf32>
    %180 = arith.mulf %171, %147 : vector<8x128xf32>
    %181 = arith.mulf %165, %173 : vector<8x128xf32>
    %182 = arith.addf %180, %181 : vector<8x128xf32>
    %183 = math.tanh %182 : vector<8x128xf32>
    %184 = arith.mulf %179, %183 : vector<8x128xf32>
    %c0_58 = arith.constant 0 : index
    %185 = arith.index_cast %c4_i32 : i32 to index
    %c0_59 = arith.constant 0 : index
    %c0_60 = arith.constant 0 : index
    %186 = vector.load %arg6[%c0_58, %185, %c0_59, %c0_60] : memref<1x8x8x128xf32, #tpu.memory_space<vmem>>, vector<1x1x8x128xf32>
    %187 = vector.shape_cast %186 : vector<1x1x8x128xf32> to vector<8x128xf32>
    %188 = vector.shape_cast %184 : vector<8x128xf32> to vector<1x1x8x128xf32>
    tpu.vector_store %arg6[%c0_58, %185, %c0_59, %c0_60], %188 {strides = array<i32>} : memref<1x8x8x128xf32, #tpu.memory_space<vmem>>, vector<1x1x8x128xf32>,
    %c5_i32 = arith.constant 5 : i32
    %c8_i32_61 = arith.constant 8 : i32
    %189 = arith.muli %c5_i32, %c8_i32_61 : i32
    %190 = tpu.assume_multiple %189, 8 : i32
    %191 = arith.index_cast %190 : i32 to index
    %c0_62 = arith.constant 0 : index
    %192 = vector.load %arg8[%191, %c0_62] : memref<64x512xf32, #tpu.memory_space<vmem>>, vector<8x512xf32>
    %cst_63 = arith.constant dense<0.000000e+00> : vector<8x512xf32>
    %193 = tpu.matmul %184, %11, %cst_63 {dimension_numbers = #tpu.dot_dimension_numbers<[1], [0], [0], [1], [0, 0, 1, 1], [], []>} : vector<8x128xf32>, vector<128x512xf32>, vector<8x512xf32> -> vector<8x512xf32>
    %194 = arith.addf %192, %193 : vector<8x512xf32>
    %195 = vector.extract_strided_slice %194 {offsets = [0, 0], sizes = [8, 128], strides = [1, 1]} : vector<8x512xf32> to vector<8x128xf32>
    %196 = arith.negf %195 : vector<8x128xf32>
    %197 = math.exp %196 : vector<8x128xf32>
    %cst_64 = arith.constant 1.000000e+00 : f32
    %198 = vector.broadcast %cst_64 : f32 to vector<8x128xf32>
    %199 = arith.addf %198, %197 : vector<8x128xf32>
    %200 = arith.divf %198, %199 : vector<8x128xf32>
    %201 = vector.extract_strided_slice %194 {offsets = [0, 128], sizes = [8, 128], strides = [1, 1]} : vector<8x512xf32> to vector<8x128xf32>
    %202 = arith.negf %201 : vector<8x128xf32>
    %203 = math.exp %202 : vector<8x128xf32>
    %cst_65 = arith.constant 1.000000e+00 : f32
    %204 = vector.broadcast %cst_65 : f32 to vector<8x128xf32>
    %205 = arith.addf %204, %203 : vector<8x128xf32>
    %206 = arith.divf %204, %205 : vector<8x128xf32>
    %207 = vector.extract_strided_slice %194 {offsets = [0, 256], sizes = [8, 128], strides = [1, 1]} : vector<8x512xf32> to vector<8x128xf32>
    %208 = math.tanh %207 : vector<8x128xf32>
    %209 = vector.extract_strided_slice %194 {offsets = [0, 384], sizes = [8, 128], strides = [1, 1]} : vector<8x512xf32> to vector<8x128xf32>
    %210 = arith.negf %209 : vector<8x128xf32>
    %211 = math.exp %210 : vector<8x128xf32>
    %cst_66 = arith.constant 1.000000e+00 : f32
    %212 = vector.broadcast %cst_66 : f32 to vector<8x128xf32>
    %213 = arith.addf %212, %211 : vector<8x128xf32>
    %214 = arith.divf %212, %213 : vector<8x128xf32>
    %215 = arith.mulf %206, %182 : vector<8x128xf32>
    %216 = arith.mulf %200, %208 : vector<8x128xf32>
    %217 = arith.addf %215, %216 : vector<8x128xf32>
    %218 = math.tanh %217 : vector<8x128xf32>
    %219 = arith.mulf %214, %218 : vector<8x128xf32>
    %c0_67 = arith.constant 0 : index
    %220 = arith.index_cast %c5_i32 : i32 to index
    %c0_68 = arith.constant 0 : index
    %c0_69 = arith.constant 0 : index
    %221 = vector.load %arg6[%c0_67, %220, %c0_68, %c0_69] : memref<1x8x8x128xf32, #tpu.memory_space<vmem>>, vector<1x1x8x128xf32>
    %222 = vector.shape_cast %221 : vector<1x1x8x128xf32> to vector<8x128xf32>
    %223 = vector.shape_cast %219 : vector<8x128xf32> to vector<1x1x8x128xf32>
    tpu.vector_store %arg6[%c0_67, %220, %c0_68, %c0_69], %223 {strides = array<i32>} : memref<1x8x8x128xf32, #tpu.memory_space<vmem>>, vector<1x1x8x128xf32>,
    %c6_i32 = arith.constant 6 : i32
    %c8_i32_70 = arith.constant 8 : i32
    %224 = arith.muli %c6_i32, %c8_i32_70 : i32
    %225 = tpu.assume_multiple %224, 8 : i32
    %226 = arith.index_cast %225 : i32 to index
    %c0_71 = arith.constant 0 : index
    %227 = vector.load %arg8[%226, %c0_71] : memref<64x512xf32, #tpu.memory_space<vmem>>, vector<8x512xf32>
    %cst_72 = arith.constant dense<0.000000e+00> : vector<8x512xf32>
    %228 = tpu.matmul %219, %11, %cst_72 {dimension_numbers = #tpu.dot_dimension_numbers<[1], [0], [0], [1], [0, 0, 1, 1], [], []>} : vector<8x128xf32>, vector<128x512xf32>, vector<8x512xf32> -> vector<8x512xf32>
    %229 = arith.addf %227, %228 : vector<8x512xf32>
    %230 = vector.extract_strided_slice %229 {offsets = [0, 0], sizes = [8, 128], strides = [1, 1]} : vector<8x512xf32> to vector<8x128xf32>
    %231 = arith.negf %230 : vector<8x128xf32>
    %232 = math.exp %231 : vector<8x128xf32>
    %cst_73 = arith.constant 1.000000e+00 : f32
    %233 = vector.broadcast %cst_73 : f32 to vector<8x128xf32>
    %234 = arith.addf %233, %232 : vector<8x128xf32>
    %235 = arith.divf %233, %234 : vector<8x128xf32>
    %236 = vector.extract_strided_slice %229 {offsets = [0, 128], sizes = [8, 128], strides = [1, 1]} : vector<8x512xf32> to vector<8x128xf32>
    %237 = arith.negf %236 : vector<8x128xf32>
    %238 = math.exp %237 : vector<8x128xf32>
    %cst_74 = arith.constant 1.000000e+00 : f32
    %239 = vector.broadcast %cst_74 : f32 to vector<8x128xf32>
    %240 = arith.addf %239, %238 : vector<8x128xf32>
    %241 = arith.divf %239, %240 : vector<8x128xf32>
    %242 = vector.extract_strided_slice %229 {offsets = [0, 256], sizes = [8, 128], strides = [1, 1]} : vector<8x512xf32> to vector<8x128xf32>
    %243 = math.tanh %242 : vector<8x128xf32>
    %244 = vector.extract_strided_slice %229 {offsets = [0, 384], sizes = [8, 128], strides = [1, 1]} : vector<8x512xf32> to vector<8x128xf32>
    %245 = arith.negf %244 : vector<8x128xf32>
    %246 = math.exp %245 : vector<8x128xf32>
    %cst_75 = arith.constant 1.000000e+00 : f32
    %247 = vector.broadcast %cst_75 : f32 to vector<8x128xf32>
    %248 = arith.addf %247, %246 : vector<8x128xf32>
    %249 = arith.divf %247, %248 : vector<8x128xf32>
    %250 = arith.mulf %241, %217 : vector<8x128xf32>
    %251 = arith.mulf %235, %243 : vector<8x128xf32>
    %252 = arith.addf %250, %251 : vector<8x128xf32>
    %253 = math.tanh %252 : vector<8x128xf32>
    %254 = arith.mulf %249, %253 : vector<8x128xf32>
    %c0_76 = arith.constant 0 : index
    %255 = arith.index_cast %c6_i32 : i32 to index
    %c0_77 = arith.constant 0 : index
    %c0_78 = arith.constant 0 : index
    %256 = vector.load %arg6[%c0_76, %255, %c0_77, %c0_78] : memref<1x8x8x128xf32, #tpu.memory_space<vmem>>, vector<1x1x8x128xf32>
    %257 = vector.shape_cast %256 : vector<1x1x8x128xf32> to vector<8x128xf32>
    %258 = vector.shape_cast %254 : vector<8x128xf32> to vector<1x1x8x128xf32>
    tpu.vector_store %arg6[%c0_76, %255, %c0_77, %c0_78], %258 {strides = array<i32>} : memref<1x8x8x128xf32, #tpu.memory_space<vmem>>, vector<1x1x8x128xf32>,
    %c7_i32 = arith.constant 7 : i32
    %c8_i32_79 = arith.constant 8 : i32
    %259 = arith.muli %c7_i32, %c8_i32_79 : i32
    %260 = tpu.assume_multiple %259, 8 : i32
    %261 = arith.index_cast %260 : i32 to index
    %c0_80 = arith.constant 0 : index
    %262 = vector.load %arg8[%261, %c0_80] : memref<64x512xf32, #tpu.memory_space<vmem>>, vector<8x512xf32>
    %cst_81 = arith.constant dense<0.000000e+00> : vector<8x512xf32>
    %263 = tpu.matmul %254, %11, %cst_81 {dimension_numbers = #tpu.dot_dimension_numbers<[1], [0], [0], [1], [0, 0, 1, 1], [], []>} : vector<8x128xf32>, vector<128x512xf32>, vector<8x512xf32> -> vector<8x512xf32>
    %264 = arith.addf %262, %263 : vector<8x512xf32>
    %265 = vector.extract_strided_slice %264 {offsets = [0, 0], sizes = [8, 128], strides = [1, 1]} : vector<8x512xf32> to vector<8x128xf32>
    %266 = arith.negf %265 : vector<8x128xf32>
    %267 = math.exp %266 : vector<8x128xf32>
    %cst_82 = arith.constant 1.000000e+00 : f32
    %268 = vector.broadcast %cst_82 : f32 to vector<8x128xf32>
    %269 = arith.addf %268, %267 : vector<8x128xf32>
    %270 = arith.divf %268, %269 : vector<8x128xf32>
    %271 = vector.extract_strided_slice %264 {offsets = [0, 128], sizes = [8, 128], strides = [1, 1]} : vector<8x512xf32> to vector<8x128xf32>
    %272 = arith.negf %271 : vector<8x128xf32>
    %273 = math.exp %272 : vector<8x128xf32>
    %cst_83 = arith.constant 1.000000e+00 : f32
    %274 = vector.broadcast %cst_83 : f32 to vector<8x128xf32>
    %275 = arith.addf %274, %273 : vector<8x128xf32>
    %276 = arith.divf %274, %275 : vector<8x128xf32>
    %277 = vector.extract_strided_slice %264 {offsets = [0, 256], sizes = [8, 128], strides = [1, 1]} : vector<8x512xf32> to vector<8x128xf32>
    %278 = math.tanh %277 : vector<8x128xf32>
    %279 = vector.extract_strided_slice %264 {offsets = [0, 384], sizes = [8, 128], strides = [1, 1]} : vector<8x512xf32> to vector<8x128xf32>
    %280 = arith.negf %279 : vector<8x128xf32>
    %281 = math.exp %280 : vector<8x128xf32>
    %cst_84 = arith.constant 1.000000e+00 : f32
    %282 = vector.broadcast %cst_84 : f32 to vector<8x128xf32>
    %283 = arith.addf %282, %281 : vector<8x128xf32>
    %284 = arith.divf %282, %283 : vector<8x128xf32>
    %285 = arith.mulf %276, %252 : vector<8x128xf32>
    %286 = arith.mulf %270, %278 : vector<8x128xf32>
    %287 = arith.addf %285, %286 : vector<8x128xf32>
    %288 = math.tanh %287 : vector<8x128xf32>
    %289 = arith.mulf %284, %288 : vector<8x128xf32>
    %c0_85 = arith.constant 0 : index
    %290 = arith.index_cast %c7_i32 : i32 to index
    %c0_86 = arith.constant 0 : index
    %c0_87 = arith.constant 0 : index
    %291 = vector.load %arg6[%c0_85, %290, %c0_86, %c0_87] : memref<1x8x8x128xf32, #tpu.memory_space<vmem>>, vector<1x1x8x128xf32>
    %292 = vector.shape_cast %291 : vector<1x1x8x128xf32> to vector<8x128xf32>
    %293 = vector.shape_cast %289 : vector<8x128xf32> to vector<1x1x8x128xf32>
    tpu.vector_store %arg6[%c0_85, %290, %c0_86, %c0_87], %293 {strides = array<i32>} : memref<1x8x8x128xf32, #tpu.memory_space<vmem>>, vector<1x1x8x128xf32>,
    %c8_i32_88 = arith.constant 8 : i32
    %c0_89 = arith.constant 0 : index
    %c0_90 = arith.constant 0 : index
    %294 = vector.load %arg9[%c0_89, %c0_90] : memref<8x128xf32, #tpu.memory_space<vmem>>, vector<8x128xf32>
    tpu.vector_store %arg9[%c0_89, %c0_90], %289 {strides = array<i32>} : memref<8x128xf32, #tpu.memory_space<vmem>>, vector<8x128xf32>,
    %c0_91 = arith.constant 0 : index
    %c0_92 = arith.constant 0 : index
    %295 = vector.load %arg10[%c0_91, %c0_92] : memref<8x128xf32, #tpu.memory_space<vmem>>, vector<8x128xf32>
    tpu.vector_store %arg10[%c0_91, %c0_92], %287 {strides = array<i32>} : memref<8x128xf32, #tpu.memory_space<vmem>>, vector<8x128xf32>,
    %c0_i32_93 = arith.constant 0 : i32
    %296 = arith.cmpi eq, %arg1, %c0_i32_93 : i32
    %297 = arith.extui %296 : i1 to i32
    %c0_i32_94 = arith.constant 0 : i32
    %298 = arith.cmpi ne, %297, %c0_i32_94 : i32
    scf.if %298 {
      %c0_95 = arith.constant 0 : index
      %c0_96 = arith.constant 0 : index
      %299 = vector.load %arg10[%c0_95, %c0_96] : memref<8x128xf32, #tpu.memory_space<vmem>>, vector<8x128xf32>
      %c0_97 = arith.constant 0 : index
      %c0_98 = arith.constant 0 : index
      %c0_99 = arith.constant 0 : index
      %300 = vector.load %arg7[%c0_97, %c0_98, %c0_99] : memref<1x8x128xf32, #tpu.memory_space<vmem>>, vector<1x8x128xf32>
      %301 = vector.shape_cast %300 : vector<1x8x128xf32> to vector<8x128xf32>
      %302 = vector.shape_cast %299 : vector<8x128xf32> to vector<1x8x128xf32>
      tpu.vector_store %arg7[%c0_97, %c0_98, %c0_99], %302 {strides = array<i32>} : memref<1x8x128xf32, #tpu.memory_space<vmem>>, vector<1x8x128xf32>,
    } else {
    }
    return
  }
  func.func @transform_0(%arg0: i32, %arg1: i32) -> (i32, i32, i32, i32) {
    %c0_i32 = arith.constant 0 : i32
    %c0_i32_0 = arith.constant 0 : i32
    %c0_i32_1 = arith.constant 0 : i32
    return %arg0, %arg1, %c0_i32, %c0_i32_0 : i32, i32, i32, i32
  }
  func.func @transform_1(%arg0: i32, %arg1: i32) -> (i32, i32) {
    %c0_i32 = arith.constant 0 : i32
    %c0_i32_0 = arith.constant 0 : i32
    %c0_i32_1 = arith.constant 0 : i32
    return %c0_i32, %c0_i32_0 : i32, i32
  }
  func.func @transform_2(%arg0: i32, %arg1: i32) -> (i32, i32) {
    %c0_i32 = arith.constant 0 : i32
    %c0_i32_0 = arith.constant 0 : i32
    %c0_i32_1 = arith.constant 0 : i32
    return %c0_i32, %c0_i32_0 : i32, i32
  }
  func.func @transform_3(%arg0: i32, %arg1: i32) -> (i32, i32) {
    %c0_i32 = arith.constant 0 : i32
    %c0_i32_0 = arith.constant 0 : i32
    %c0_i32_1 = arith.constant 0 : i32
    return %c0_i32, %c0_i32_0 : i32, i32
  }
  func.func @transform_4(%arg0: i32, %arg1: i32) -> (i32, i32, i32, i32) {
    %c0_i32 = arith.constant 0 : i32
    %c0_i32_0 = arith.constant 0 : i32
    %c0_i32_1 = arith.constant 0 : i32
    return %arg0, %arg1, %c0_i32, %c0_i32_0 : i32, i32, i32, i32
  }
  func.func @transform_5(%arg0: i32, %arg1: i32) -> (i32, i32, i32) {
    %c0_i32 = arith.constant 0 : i32
    %c0_i32_0 = arith.constant 0 : i32
    %c0_i32_1 = arith.constant 0 : i32
    return %arg0, %c0_i32, %c0_i32_0 : i32, i32, i32
  }
}

</mosaic_0001>

<llo_original>
// kernel: tpu_custom_call.1
$region0: #{tpu_custom_call.1}
  #allocation0 [shape = 'u32[]', space=smem, size = 0x4, offset = 0x4, fixed_abs, tag = 'smem constant byte address 0x4 - core index']
  #allocation1 [shape = 'u32[144,128]{1,0:T(1,128)}', space=vmem, size = 0x12000, scoped, tag = 'internal scratch']
  #allocation2 [shape = 'f32[64,512]{1,0:T(8,128)}', space=vmem, size = 0x20000, scoped, tag = 'scratch operand']
  #allocation3 [shape = 'f32[8,128]{1,0:T(8,128)}', space=vmem, size = 0x1000, scoped, tag = 'scratch operand']
  #allocation4 [shape = 'f32[8,128]{1,0:T(8,128)}', space=vmem, size = 0x1000, scoped, tag = 'scratch operand']
  %s0 = inlined_call_operand.hbm [shape: f32[1,1,64,128], index: 0, kind: input, shape index: {}]
  %s1 = inlined_call_operand.hbm [shape: f32[128,512], index: 1, kind: input, shape index: {}]
  %s2 = inlined_call_operand.hbm [shape: f32[128,512], index: 2, kind: input, shape index: {}]
  %s3 = inlined_call_operand.vmem [shape: f32[1,512], index: 3, kind: input, shape index: {}]
  %s4 = inlined_call_operand.hbm [shape: f32[1,8,8,128], index: 4, kind: output, shape index: {0}]
  %s5 = inlined_call_operand.hbm [shape: f32[1,8,128], index: 5, kind: output, shape index: {1}]
  %6 = xla_tuple %s4, %s5
  %s7 = sld [smem:[#allocation0]]
  $region54: #{tpu_custom_call.1} parent=0
    _
  %s9 = ssub.s32 1, %s7
  %s10 = scalar_select 0, %s9, %s7
  $region1: #{tpu_custom_call.1} parent=0
    #allocation5 [shape = 'u8[32768]{0}', space=vmem, size = 0x8000, scoped, tag = 'input window, operand 0, single buffered']
    #allocation6 [shape = 's32[1]{0}', space=sflag, size = 0x4, scoped, tag = 'scoped memory for tpu_custom_call.1']
    #allocation7 [shape = 's32[1]{0}', space=sflag, size = 0x4, scoped, tag = 'scoped memory for tpu_custom_call.1']
    #allocation8 [shape = 'u8[262144]{0}', space=vmem, size = 0x40000, scoped, tag = 'input window, operand 1, single buffered']
    #allocation9 [shape = 's32[1]{0}', space=sflag, size = 0x4, scoped, tag = 'scoped memory for tpu_custom_call.1']
    #allocation10 [shape = 'u8[262144]{0}', space=vmem, size = 0x40000, scoped, tag = 'input window, operand 2, single buffered']
    #allocation11 [shape = 'u8[32768]{0}', space=vmem, size = 0x8000, scoped, tag = 'output window, operand 0, single buffered']
    #allocation12 [shape = 'u8[4096]{0}', space=vmem, size = 0x1000, scoped, tag = 'output window, operand 1, single buffered']
    #allocation13 [shape = 's32[1]{0}', space=sflag, size = 0x4, scoped, tag = 'scoped memory for tpu_custom_call.1']
    %11 = vsyncpa [#allocation6], 0
    %12 = vsyncpa [#allocation9], 0
    %13 = vsyncpa [#allocation7], 0
    %14 = vsyncpa [#allocation13], 0
    // Predicated region
    $region2: #{tpu_custom_call.1} parent=1 // pred_check
      _
    $region3: #{tpu_custom_call.1} parent=1 // pred_check_branch
      %16 = sbr.rel (0) target = $region5
    $region4: #{tpu_custom_call.1} parent=1 // pred_region
      %s18 = ssub.s32 1024, 1024
      %19 = vsyncadd [#allocation6], %s18
      %s20 = sshll.u32 [#allocation5], 4
      %s21 = int_to_ptr.vmem [resolvable:$true] %s20
      %26 = dma.hbm_to_vmem [thread:$0]  %s0, 1024, %s21, [#allocation6], 128, 128, 8
    $region5: #{tpu_custom_call.1} parent=1 // pred_fallthru
      _
    // Predicated region
    $region6: #{tpu_custom_call.1} parent=1 // pred_check
      _
    $region7: #{tpu_custom_call.1} parent=1 // pred_check_branch
      %28 = sbr.rel (0) target = $region9
    $region8: #{tpu_custom_call.1} parent=1 // pred_region
      %s30 = ssub.s32 8192, 8192
      %31 = vsyncadd [#allocation9], %s30
      %s32 = sshll.u32 [#allocation8], 4
      %s33 = int_to_ptr.vmem [resolvable:$true] %s32
      %38 = dma.hbm_to_vmem [thread:$0]  %s1, 8192, %s33, [#allocation9], 512, 512, 32
    $region9: #{tpu_custom_call.1} parent=1 // pred_fallthru
      _
    // Predicated region
    $region10: #{tpu_custom_call.1} parent=1 // pred_check
      _
    $region11: #{tpu_custom_call.1} parent=1 // pred_check_branch
      %40 = sbr.rel (0) target = $region13
    $region12: #{tpu_custom_call.1} parent=1 // pred_region
      %s42 = ssub.s32 8192, 8192
      %43 = vsyncadd [#allocation9], %s42
      %s44 = sshll.u32 [#allocation10], 4
      %s45 = int_to_ptr.vmem [resolvable:$true] %s44
      %50 = dma.hbm_to_vmem [thread:$0]  %s2, 8192, %s45, [#allocation9], 512, 512, 32
    $region13: #{tpu_custom_call.1} parent=1 // pred_fallthru
      _
    // Predicated region
    $region14: #{tpu_custom_call.1} parent=1 // pred_check
      _
    $region15: #{tpu_custom_call.1} parent=1 // pred_check_branch
      %52 = sbr.rel (0) target = $region17
    $region16: #{tpu_custom_call.1} parent=1 // pred_region
      _
    $region17: #{tpu_custom_call.1} parent=1 // pred_fallthru
      _
    // Predicated region
    $region18: #{tpu_custom_call.1} parent=1 // pred_check
      _
    $region19: #{tpu_custom_call.1} parent=1 // pred_check_branch
      %54 = sbr.rel (0) target = $region21
    $region20: #{tpu_custom_call.1} parent=1 // pred_region
      %55 = dma.done [#allocation6], 1024
    $region21: #{tpu_custom_call.1} parent=1 // pred_fallthru
      _
    // Predicated region
    $region22: #{tpu_custom_call.1} parent=1 // pred_check
      _
    $region23: #{tpu_custom_call.1} parent=1 // pred_check_branch
      %57 = sbr.rel (0) target = $region25
    $region24: #{tpu_custom_call.1} parent=1 // pred_region
      %58 = dma.done [#allocation9], 8192
    $region25: #{tpu_custom_call.1} parent=1 // pred_fallthru
      _
    // Predicated region
    $region26: #{tpu_custom_call.1} parent=1 // pred_check
      _
    $region27: #{tpu_custom_call.1} parent=1 // pred_check_branch
      %60 = sbr.rel (0) target = $region29
    $region28: #{tpu_custom_call.1} parent=1 // pred_region
      %61 = dma.done [#allocation9], 8192
    $region29: #{tpu_custom_call.1} parent=1 // pred_fallthru
      _
    %p62 = scmp.eq.s32.totalorder 0, 0
    // Predicated region
    $region30: #{tpu_custom_call.1} parent=1 // pred_check
      %p63 = pneg %p62
    $region31: #{tpu_custom_call.1} parent=1 // pred_check_branch
      %65 = sbr.rel (%p63) target = $region33
    $region32: #{tpu_custom_call.1} parent=1 // pred_region
      %66 = vst [vmem:[#allocation3] sm:$0xff] 0.0
      %67 = vst [vmem:[#allocation4] sm:$0xff] 0.0
    $region33: #{tpu_custom_call.1} parent=1 // pred_fallthru
      _
    %v68 = vld [vmem:[#allocation5] sm:$0xff]
    %v69 = vld [vmem:[#allocation5 + $0x8] sm:$0xff]
    %v70 = vld [vmem:[#allocation5 + $0x10] sm:$0xff]
    %v71 = vld [vmem:[#allocation5 + $0x18] sm:$0xff]
    %v72 = vld [vmem:[#allocation5 + $0x20] sm:$0xff]
    %v73 = vld [vmem:[#allocation5 + $0x28] sm:$0xff]
    %v74 = vld [vmem:[#allocation5 + $0x30] sm:$0xff]
    %v75 = vld [vmem:[#allocation5 + $0x38] sm:$0xff]
    %v76 = vld [vmem:[#allocation8] sm:$0xff]
    %v77 = vld [vmem:[#allocation8 + $0x8] sm:$0xff]
    %v78 = vld [vmem:[#allocation8 + $0x10] sm:$0xff]
    %v79 = vld [vmem:[#allocation8 + $0x18] sm:$0xff]
    %v80 = vld [vmem:[#allocation8 + $0x20] sm:$0xff]
    %v81 = vld [vmem:[#allocation8 + $0x28] sm:$0xff]
    %v82 = vld [vmem:[#allocation8 + $0x30] sm:$0xff]
    %v83 = vld [vmem:[#allocation8 + $0x38] sm:$0xff]
    %v84 = vld [vmem:[#allocation8 + $0x40] sm:$0xff]
    %v85 = vld [vmem:[#allocation8 + $0x48] sm:$0xff]
    %v86 = vld [vmem:[#allocation8 + $0x50] sm:$0xff]
    %v87 = vld [vmem:[#allocation8 + $0x58] sm:$0xff]
    %v88 = vld [vmem:[#allocation8 + $0x60] sm:$0xff]
    %v89 = vld [vmem:[#allocation8 + $0x68] sm:$0xff]
    %v90 = vld [vmem:[#allocation8 + $0x70] sm:$0xff]
    %v91 = vld [vmem:[#allocation8 + $0x78] sm:$0xff]
    %v92 = vld [vmem:[#allocation8 + $0x80] sm:$0xff]
    %v93 = vld [vmem:[#allocation8 + $0x88] sm:$0xff]
    %v94 = vld [vmem:[#allocation8 + $0x90] sm:$0xff]
    %v95 = vld [vmem:[#allocation8 + $0x98] sm:$0xff]
    %v96 = vld [vmem:[#allocation8 + $0xa0] sm:$0xff]
    %v97 = vld [vmem:[#allocation8 + $0xa8] sm:$0xff]
    %v98 = vld [vmem:[#allocation8 + $0xb0] sm:$0xff]
    %v99 = vld [vmem:[#allocation8 + $0xb8] sm:$0xff]
    %v100 = vld [vmem:[#allocation8 + $0xc0] sm:$0xff]
    %v101 = vld [vmem:[#allocation8 + $0xc8] sm:$0xff]
    %v102 = vld [vmem:[#allocation8 + $0xd0] sm:$0xff]
    %v103 = vld [vmem:[#allocation8 + $0xd8] sm:$0xff]
    %v104 = vld [vmem:[#allocation8 + $0xe0] sm:$0xff]
    %v105 = vld [vmem:[#allocation8 + $0xe8] sm:$0xff]
    %v106 = vld [vmem:[#allocation8 + $0xf0] sm:$0xff]
    %v107 = vld [vmem:[#allocation8 + $0xf8] sm:$0xff]
    %v108 = vld [vmem:[#allocation8 + $0x100] sm:$0xff]
    %v109 = vld [vmem:[#allocation8 + $0x108] sm:$0xff]
    %v110 = vld [vmem:[#allocation8 + $0x110] sm:$0xff]
    %v111 = vld [vmem:[#allocation8 + $0x118] sm:$0xff]
    %v112 = vld [vmem:[#allocation8 + $0x120] sm:$0xff]
    %v113 = vld [vmem:[#allocation8 + $0x128] sm:$0xff]
    %v114 = vld [vmem:[#allocation8 + $0x130] sm:$0xff]
    %v115 = vld [vmem:[#allocation8 + $0x138] sm:$0xff]
    %v116 = vld [vmem:[#allocation8 + $0x140] sm:$0xff]
    %v117 = vld [vmem:[#allocation8 + $0x148] sm:$0xff]
    %v118 = vld [vmem:[#allocation8 + $0x150] sm:$0xff]
    %v119 = vld [vmem:[#allocation8 + $0x158] sm:$0xff]
    %v120 = vld [vmem:[#allocation8 + $0x160] sm:$0xff]
    %v121 = vld [vmem:[#allocation8 + $0x168] sm:$0xff]
    %v122 = vld [vmem:[#allocation8 + $0x170] sm:$0xff]
    %v123 = vld [vmem:[#allocation8 + $0x178] sm:$0xff]
    %v124 = vld [vmem:[#allocation8 + $0x180] sm:$0xff]
    %v125 = vld [vmem:[#allocation8 + $0x188] sm:$0xff]
    %v126 = vld [vmem:[#allocation8 + $0x190] sm:$0xff]
    %v127 = vld [vmem:[#allocation8 + $0x198] sm:$0xff]
    %v128 = vld [vmem:[#allocation8 + $0x1a0] sm:$0xff]
    %v129 = vld [vmem:[#allocation8 + $0x1a8] sm:$0xff]
    %v130 = vld [vmem:[#allocation8 + $0x1b0] sm:$0xff]
    %v131 = vld [vmem:[#allocation8 + $0x1b8] sm:$0xff]
    %v132 = vld [vmem:[#allocation8 + $0x1c0] sm:$0xff]
    %v133 = vld [vmem:[#allocation8 + $0x1c8] sm:$0xff]
    %v134 = vld [vmem:[#allocation8 + $0x1d0] sm:$0xff]
    %v135 = vld [vmem:[#allocation8 + $0x1d8] sm:$0xff]
    %v136 = vld [vmem:[#allocation8 + $0x1e0] sm:$0xff]
    %v137 = vld [vmem:[#allocation8 + $0x1e8] sm:$0xff]
    %v138 = vld [vmem:[#allocation8 + $0x1f0] sm:$0xff]
    %v139 = vld [vmem:[#allocation8 + $0x1f8] sm:$0xff]
    %v140 = vld [vmem:[%s3] sm:$0xf]
    %v142 = vlaneseq
    %v143 = vshrl.u32 %v142, 7
    %v144 = vsub.s32 0, %v143
    %v145 = vrot.slane %v140, %v144
    %v146 = vlaneseq
    %v147 = vshrl.u32 %v146, 7
    %v148 = vsub.s32 1, %v147
    %v149 = vrot.slane %v140, %v148
    %v150 = vlaneseq
    %v151 = vshrl.u32 %v150, 7
    %v152 = vsub.s32 2, %v151
    %v153 = vrot.slane %v140, %v152
    %v154 = vlaneseq
    %v155 = vshrl.u32 %v154, 7
    %v156 = vsub.s32 3, %v155
    %v157 = vrot.slane %v140, %v156
    %162 = vmatprep.subr.mxu0 %v77
    %163 = vmatpush1.msra.mxu0 %v76
    %164 = vmatprep.subr.mxu0 %v81
    %165 = vmatpush1.msra.mxu0 %v80
    %166 = vmatprep.subr.mxu0 %v85
    %167 = vmatpush1.msra.mxu0 %v84
    %168 = vmatprep.subr.mxu0 %v89
    %169 = vmatpush1.msra.mxu0 %v88
    %170 = vmatprep.subr.mxu0 %v93
    %171 = vmatpush1.msra.mxu0 %v92
    %172 = vmatprep.subr.mxu0 %v97
    %173 = vmatpush1.msra.mxu0 %v96
    %174 = vmatprep.subr.mxu0 %v101
    %175 = vmatpush1.msra.mxu0 %v100
    %176 = vmatprep.subr.mxu0 %v105
    %177 = vmatpush1.msra.mxu0 %v104
    %178 = vmatprep.subr.mxu0 %v109
    %179 = vmatpush1.msra.mxu0 %v108
    %180 = vmatprep.subr.mxu0 %v113
    %181 = vmatpush1.msra.mxu0 %v112
    %182 = vmatprep.subr.mxu0 %v117
    %183 = vmatpush1.msra.mxu0 %v116
    %184 = vmatprep.subr.mxu0 %v121
    %185 = vmatpush1.msra.mxu0 %v120
    %186 = vmatprep.subr.mxu0 %v125
    %187 = vmatpush1.msra.mxu0 %v124
    %188 = vmatprep.subr.mxu0 %v129
    %189 = vmatpush1.msra.mxu0 %v128
    %190 = vmatprep.subr.mxu0 %v133
    %191 = vmatpush1.msra.mxu0 %v132
    %192 = vmatprep.subr.mxu0 %v137
    %193 = vmatpush1.msra.mxu0 %v136
    %194 = vmatprep.subr.mxu0 0.0
    %195 = vmatpush1.msra.mxu0 0.0
    %196 = vmatprep.subr.mxu0 0.0
    %197 = vmatpush1.msra.mxu0 0.0
    %198 = vmatprep.subr.mxu0 0.0
    %199 = vmatpush1.msra.mxu0 0.0
    %200 = vmatprep.subr.mxu0 0.0
    %201 = vmatpush1.msra.mxu0 0.0
    %202 = vmatprep.subr.mxu0 0.0
    %203 = vmatpush1.msra.mxu0 0.0
    %204 = vmatprep.subr.mxu0 0.0
    %205 = vmatpush1.msra.mxu0 0.0
    %206 = vmatprep.subr.mxu0 0.0
    %207 = vmatpush1.msra.mxu0 0.0
    %208 = vmatprep.subr.mxu0 0.0
    %209 = vmatpush1.msra.mxu0 0.0
    %210 = vmatprep.subr.mxu0 0.0
    %211 = vmatpush1.msra.mxu0 0.0
    %212 = vmatprep.subr.mxu0 0.0
    %213 = vmatpush1.msra.mxu0 0.0
    %214 = vmatprep.subr.mxu0 0.0
    %215 = vmatpush1.msra.mxu0 0.0
    %216 = vmatprep.subr.mxu0 0.0
    %217 = vmatpush1.msra.mxu0 0.0
    %218 = vmatprep.subr.mxu0 0.0
    %219 = vmatpush1.msra.mxu0 0.0
    %220 = vmatprep.subr.mxu0 0.0
    %221 = vmatpush1.msra.mxu0 0.0
    %222 = vmatprep.subr.mxu0 0.0
    %223 = vmatpush1.msra.mxu0 0.0
    %224 = vmatprep.subr.mxu0 0.0
    %225 = vmatpush1.msra.mxu0 0.0
    %226 = vmatprep.mubr.f32.mxu0 0.0
    %227 = vmatmul.mubr.f32.gmra.mrb[0].mxu0 %v68
    %v228 = vpop.f32.mrb[0].mxu0
    %v229 = vadd.f32 %v145, %v228
    %v230 = vpop.f32.mrb[0].mxu0
    %v231 = vadd.f32 %v149, %v230
    %232 = vmatprep.mubr.f32.mxu0 0.0
    %233 = vmatmul.mubr.f32.gmra.mrb[0].mxu0 %v69
    %v234 = vpop.f32.mrb[0].mxu0
    %v235 = vadd.f32 %v145, %v234
    %v236 = vpop.f32.mrb[0].mxu0
    %v237 = vadd.f32 %v149, %v236
    %238 = vmatprep.mubr.f32.mxu0 0.0
    %239 = vmatmul.mubr.f32.gmra.mrb[0].mxu0 %v70
    %v240 = vpop.f32.mrb[0].mxu0
    %v241 = vadd.f32 %v145, %v240
    %v242 = vpop.f32.mrb[0].mxu0
    %v243 = vadd.f32 %v149, %v242
    %244 = vmatprep.mubr.f32.mxu0 0.0
    %245 = vmatmul.mubr.f32.gmra.mrb[0].mxu0 %v71
    %v246 = vpop.f32.mrb[0].mxu0
    %v247 = vadd.f32 %v145, %v246
    %v248 = vpop.f32.mrb[0].mxu0
    %v249 = vadd.f32 %v149, %v248
    %250 = vmatprep.mubr.f32.mxu0 0.0
    %251 = vmatmul.mubr.f32.gmra.mrb[0].mxu0 %v72
    %v252 = vpop.f32.mrb[0].mxu0
    %v253 = vadd.f32 %v145, %v252
    %v254 = vpop.f32.mrb[0].mxu0
    %v255 = vadd.f32 %v149, %v254
    %256 = vmatprep.mubr.f32.mxu0 0.0
    %257 = vmatmul.mubr.f32.gmra.mrb[0].mxu0 %v73
    %v258 = vpop.f32.mrb[0].mxu0
    %v259 = vadd.f32 %v145, %v258
    %v260 = vpop.f32.mrb[0].mxu0
    %v261 = vadd.f32 %v149, %v260
    %262 = vmatprep.mubr.f32.mxu0 0.0
    %263 = vmatmul.mubr.f32.gmra.mrb[0].mxu0 %v74
    %v264 = vpop.f32.mrb[0].mxu0
    %v265 = vadd.f32 %v145, %v264
    %v266 = vpop.f32.mrb[0].mxu0
    %v267 = vadd.f32 %v149, %v266
    %268 = vmatprep.mubr.f32.mxu0 0.0
    %269 = vmatmul.mubr.f32.gmra.mrb[0].mxu0 %v75
    %v270 = vpop.f32.mrb[0].mxu0
    %v271 = vadd.f32 %v145, %v270
    %v272 = vpop.f32.mrb[0].mxu0
    %v273 = vadd.f32 %v149, %v272
    %274 = vdwg.mxu0
    %275 = vmatprep.subr.mxu0 %v79
    %276 = vmatpush1.msra.mxu0 %v78
    %277 = vmatprep.subr.mxu0 %v83
    %278 = vmatpush1.msra.mxu0 %v82
    %279 = vmatprep.subr.mxu0 %v87
    %280 = vmatpush1.msra.mxu0 %v86
    %281 = vmatprep.subr.mxu0 %v91
    %282 = vmatpush1.msra.mxu0 %v90
    %283 = vmatprep.subr.mxu0 %v95
    %284 = vmatpush1.msra.mxu0 %v94
    %285 = vmatprep.subr.mxu0 %v99
    %286 = vmatpush1.msra.mxu0 %v98
    %287 = vmatprep.subr.mxu0 %v103
    %288 = vmatpush1.msra.mxu0 %v102
    %289 = vmatprep.subr.mxu0 %v107
    %290 = vmatpush1.msra.mxu0 %v106
    %291 = vmatprep.subr.mxu0 %v111
    %292 = vmatpush1.msra.mxu0 %v110
    %293 = vmatprep.subr.mxu0 %v115
    %294 = vmatpush1.msra.mxu0 %v114
    %295 = vmatprep.subr.mxu0 %v119
    %296 = vmatpush1.msra.mxu0 %v118
    %297 = vmatprep.subr.mxu0 %v123
    %298 = vmatpush1.msra.mxu0 %v122
    %299 = vmatprep.subr.mxu0 %v127
    %300 = vmatpush1.msra.mxu0 %v126
    %301 = vmatprep.subr.mxu0 %v131
    %302 = vmatpush1.msra.mxu0 %v130
    %303 = vmatprep.subr.mxu0 %v135
    %304 = vmatpush1.msra.mxu0 %v134
    %305 = vmatprep.subr.mxu0 %v139
    %306 = vmatpush1.msra.mxu0 %v138
    %307 = vmatprep.subr.mxu0 0.0
    %308 = vmatpush1.msra.mxu0 0.0
    %309 = vmatprep.subr.mxu0 0.0
    %310 = vmatpush1.msra.mxu0 0.0
    %311 = vmatprep.subr.mxu0 0.0
    %312 = vmatpush1.msra.mxu0 0.0
    %313 = vmatprep.subr.mxu0 0.0
    %314 = vmatpush1.msra.mxu0 0.0
    %315 = vmatprep.subr.mxu0 0.0
    %316 = vmatpush1.msra.mxu0 0.0
    %317 = vmatprep.subr.mxu0 0.0
    %318 = vmatpush1.msra.mxu0 0.0
    %319 = vmatprep.subr.mxu0 0.0
    %320 = vmatpush1.msra.mxu0 0.0
    %321 = vmatprep.subr.mxu0 0.0
    %322 = vmatpush1.msra.mxu0 0.0
    %323 = vmatprep.subr.mxu0 0.0
    %324 = vmatpush1.msra.mxu0 0.0
    %325 = vmatprep.subr.mxu0 0.0
    %326 = vmatpush1.msra.mxu0 0.0
    %327 = vmatprep.subr.mxu0 0.0
    %328 = vmatpush1.msra.mxu0 0.0
    %329 = vmatprep.subr.mxu0 0.0
    %330 = vmatpush1.msra.mxu0 0.0
    %331 = vmatprep.subr.mxu0 0.0
    %332 = vmatpush1.msra.mxu0 0.0
    %333 = vmatprep.subr.mxu0 0.0
    %334 = vmatpush1.msra.mxu0 0.0
    %335 = vmatprep.subr.mxu0 0.0
    %336 = vmatpush1.msra.mxu0 0.0
    %337 = vmatprep.subr.mxu0 0.0
    %338 = vmatpush1.msra.mxu0 0.0
    %339 = vmatprep.mubr.f32.mxu0 0.0
    %340 = vmatmul.mubr.f32.gmra.mrb[0].mxu0 %v68
    %v341 = vpop.f32.mrb[0].mxu0
    %v342 = vadd.f32 %v153, %v341
    %v343 = vpop.f32.mrb[0].mxu0
    %v344 = vadd.f32 %v157, %v343
    %345 = vmatprep.mubr.f32.mxu0 0.0
    %346 = vmatmul.mubr.f32.gmra.mrb[0].mxu0 %v69
    %v347 = vpop.f32.mrb[0].mxu0
    %v348 = vadd.f32 %v153, %v347
    %v349 = vpop.f32.mrb[0].mxu0
    %v350 = vadd.f32 %v157, %v349
    %351 = vmatprep.mubr.f32.mxu0 0.0
    %352 = vmatmul.mubr.f32.gmra.mrb[0].mxu0 %v70
    %v353 = vpop.f32.mrb[0].mxu0
    %v354 = vadd.f32 %v153, %v353
    %v355 = vpop.f32.mrb[0].mxu0
    %v356 = vadd.f32 %v157, %v355
    %357 = vmatprep.mubr.f32.mxu0 0.0
    %358 = vmatmul.mubr.f32.gmra.mrb[0].mxu0 %v71
    %v359 = vpop.f32.mrb[0].mxu0
    %v360 = vadd.f32 %v153, %v359
    %v361 = vpop.f32.mrb[0].mxu0
    %v362 = vadd.f32 %v157, %v361
    %363 = vmatprep.mubr.f32.mxu0 0.0
    %364 = vmatmul.mubr.f32.gmra.mrb[0].mxu0 %v72
    %v365 = vpop.f32.mrb[0].mxu0
    %v366 = vadd.f32 %v153, %v365
    %v367 = vpop.f32.mrb[0].mxu0
    %v368 = vadd.f32 %v157, %v367
    %369 = vmatprep.mubr.f32.mxu0 0.0
    %370 = vmatmul.mubr.f32.gmra.mrb[0].mxu0 %v73
    %v371 = vpop.f32.mrb[0].mxu0
    %v372 = vadd.f32 %v153, %v371
    %v373 = vpop.f32.mrb[0].mxu0
    %v374 = vadd.f32 %v157, %v373
    %375 = vmatprep.mubr.f32.mxu0 0.0
    %376 = vmatmul.mubr.f32.gmra.mrb[0].mxu0 %v74
    %v377 = vpop.f32.mrb[0].mxu0
    %v378 = vadd.f32 %v153, %v377
    %v379 = vpop.f32.mrb[0].mxu0
    %v380 = vadd.f32 %v157, %v379
    %381 = vmatprep.mubr.f32.mxu0 0.0
    %382 = vmatmul.mubr.f32.gmra.mrb[0].mxu0 %v75
    %v383 = vpop.f32.mrb[0].mxu0
    %v384 = vadd.f32 %v153, %v383
    %v385 = vpop.f32.mrb[0].mxu0
    %v386 = vadd.f32 %v157, %v385
    %387 = vdwg.mxu0
    %388 = vst [vmem:[#allocation2] sm:$0xff] %v229
    %389 = vst [vmem:[#allocation2 + $0x8] sm:$0xff] %v231
    %390 = vst [vmem:[#allocation2 + $0x10] sm:$0xff] %v342
    %391 = vst [vmem:[#allocation2 + $0x18] sm:$0xff] %v344
    %392 = vst [vmem:[#allocation2 + $0x20] sm:$0xff] %v235
    %393 = vst [vmem:[#allocation2 + $0x28] sm:$0xff] %v237
    %394 = vst [vmem:[#allocation2 + $0x30] sm:$0xff] %v348
    %395 = vst [vmem:[#allocation2 + $0x38] sm:$0xff] %v350
    %396 = vst [vmem:[#allocation2 + $0x40] sm:$0xff] %v241
    %397 = vst [vmem:[#allocation2 + $0x48] sm:$0xff] %v243
    %398 = vst [vmem:[#allocation2 + $0x50] sm:$0xff] %v354
    %399 = vst [vmem:[#allocation2 + $0x58] sm:$0xff] %v356
    %400 = vst [vmem:[#allocation2 + $0x60] sm:$0xff] %v247
    %401 = vst [vmem:[#allocation2 + $0x68] sm:$0xff] %v249
    %402 = vst [vmem:[#allocation2 + $0x70] sm:$0xff] %v360
    %403 = vst [vmem:[#allocation2 + $0x78] sm:$0xff] %v362
    %404 = vst [vmem:[#allocation2 + $0x80] sm:$0xff] %v253
    %405 = vst [vmem:[#allocation2 + $0x88] sm:$0xff] %v255
    %406 = vst [vmem:[#allocation2 + $0x90] sm:$0xff] %v366
    %407 = vst [vmem:[#allocation2 + $0x98] sm:$0xff] %v368
    %408 = vst [vmem:[#allocation2 + $0xa0] sm:$0xff] %v259
    %409 = vst [vmem:[#allocation2 + $0xa8] sm:$0xff] %v261
    %410 = vst [vmem:[#allocation2 + $0xb0] sm:$0xff] %v372
    %411 = vst [vmem:[#allocation2 + $0xb8] sm:$0xff] %v374
    %412 = vst [vmem:[#allocation2 + $0xc0] sm:$0xff] %v265
    %413 = vst [vmem:[#allocation2 + $0xc8] sm:$0xff] %v267
    %414 = vst [vmem:[#allocation2 + $0xd0] sm:$0xff] %v378
    %415 = vst [vmem:[#allocation2 + $0xd8] sm:$0xff] %v380
    %416 = vst [vmem:[#allocation2 + $0xe0] sm:$0xff] %v271
    %417 = vst [vmem:[#allocation2 + $0xe8] sm:$0xff] %v273
    %418 = vst [vmem:[#allocation2 + $0xf0] sm:$0xff] %v384
    %419 = vst [vmem:[#allocation2 + $0xf8] sm:$0xff] %v386
    %v420 = vld [vmem:[#allocation10] sm:$0xff]
    %v421 = vld [vmem:[#allocation10 + $0x8] sm:$0xff]
    %v422 = vld [vmem:[#allocation10 + $0x10] sm:$0xff]
    %v423 = vld [vmem:[#allocation10 + $0x18] sm:$0xff]
    %v424 = vld [vmem:[#allocation10 + $0x20] sm:$0xff]
    %v425 = vld [vmem:[#allocation10 + $0x28] sm:$0xff]
    %v426 = vld [vmem:[#allocation10 + $0x30] sm:$0xff]
    %v427 = vld [vmem:[#allocation10 + $0x38] sm:$0xff]
    %v428 = vld [vmem:[#allocation10 + $0x40] sm:$0xff]
    %v429 = vld [vmem:[#allocation10 + $0x48] sm:$0xff]
    %v430 = vld [vmem:[#allocation10 + $0x50] sm:$0xff]
    %v431 = vld [vmem:[#allocation10 + $0x58] sm:$0xff]
    %v432 = vld [vmem:[#allocation10 + $0x60] sm:$0xff]
    %v433 = vld [vmem:[#allocation10 + $0x68] sm:$0xff]
    %v434 = vld [vmem:[#allocation10 + $0x70] sm:$0xff]
    %v435 = vld [vmem:[#allocation10 + $0x78] sm:$0xff]
    %v436 = vld [vmem:[#allocation10 + $0x80] sm:$0xff]
    %v437 = vld [vmem:[#allocation10 + $0x88] sm:$0xff]
    %v438 = vld [vmem:[#allocation10 + $0x90] sm:$0xff]
    %v439 = vld [vmem:[#allocation10 + $0x98] sm:$0xff]
    %v440 = vld [vmem:[#allocation10 + $0xa0] sm:$0xff]
    %v441 = vld [vmem:[#allocation10 + $0xa8] sm:$0xff]
    %v442 = vld [vmem:[#allocation10 + $0xb0] sm:$0xff]
    %v443 = vld [vmem:[#allocation10 + $0xb8] sm:$0xff]
    %v444 = vld [vmem:[#allocation10 + $0xc0] sm:$0xff]
    %v445 = vld [vmem:[#allocation10 + $0xc8] sm:$0xff]
    %v446 = vld [vmem:[#allocation10 + $0xd0] sm:$0xff]
    %v447 = vld [vmem:[#allocation10 + $0xd8] sm:$0xff]
    %v448 = vld [vmem:[#allocation10 + $0xe0] sm:$0xff]
    %v449 = vld [vmem:[#allocation10 + $0xe8] sm:$0xff]
    %v450 = vld [vmem:[#allocation10 + $0xf0] sm:$0xff]
    %v451 = vld [vmem:[#allocation10 + $0xf8] sm:$0xff]
    %v452 = vld [vmem:[#allocation10 + $0x100] sm:$0xff]
    %v453 = vld [vmem:[#allocation10 + $0x108] sm:$0xff]
    %v454 = vld [vmem:[#allocation10 + $0x110] sm:$0xff]
    %v455 = vld [vmem:[#allocation10 + $0x118] sm:$0xff]
    %v456 = vld [vmem:[#allocation10 + $0x120] sm:$0xff]
    %v457 = vld [vmem:[#allocation10 + $0x128] sm:$0xff]
    %v458 = vld [vmem:[#allocation10 + $0x130] sm:$0xff]
    %v459 = vld [vmem:[#allocation10 + $0x138] sm:$0xff]
    %v460 = vld [vmem:[#allocation10 + $0x140] sm:$0xff]
    %v461 = vld [vmem:[#allocation10 + $0x148] sm:$0xff]
    %v462 = vld [vmem:[#allocation10 + $0x150] sm:$0xff]
    %v463 = vld [vmem:[#allocation10 + $0x158] sm:$0xff]
    %v464 = vld [vmem:[#allocation10 + $0x160] sm:$0xff]
    %v465 = vld [vmem:[#allocation10 + $0x168] sm:$0xff]
    %v466 = vld [vmem:[#allocation10 + $0x170] sm:$0xff]
    %v467 = vld [vmem:[#allocation10 + $0x178] sm:$0xff]
    %v468 = vld [vmem:[#allocation10 + $0x180] sm:$0xff]
    %v469 = vld [vmem:[#allocation10 + $0x188] sm:$0xff]
    %v470 = vld [vmem:[#allocation10 + $0x190] sm:$0xff]
    %v471 = vld [vmem:[#allocation10 + $0x198] sm:$0xff]
    %v472 = vld [vmem:[#allocation10 + $0x1a0] sm:$0xff]
    %v473 = vld [vmem:[#allocation10 + $0x1a8] sm:$0xff]
    %v474 = vld [vmem:[#allocation10 + $0x1b0] sm:$0xff]
    %v475 = vld [vmem:[#allocation10 + $0x1b8] sm:$0xff]
    %v476 = vld [vmem:[#allocation10 + $0x1c0] sm:$0xff]
    %v477 = vld [vmem:[#allocation10 + $0x1c8] sm:$0xff]
    %v478 = vld [vmem:[#allocation10 + $0x1d0] sm:$0xff]
    %v479 = vld [vmem:[#allocation10 + $0x1d8] sm:$0xff]
    %v480 = vld [vmem:[#allocation10 + $0x1e0] sm:$0xff]
    %v481 = vld [vmem:[#allocation10 + $0x1e8] sm:$0xff]
    %v482 = vld [vmem:[#allocation10 + $0x1f0] sm:$0xff]
    %v483 = vld [vmem:[#allocation10 + $0x1f8] sm:$0xff]
    %v484 = vld [vmem:[#allocation3] sm:$0xff]
    %v485 = vld [vmem:[#allocation4] sm:$0xff]
    %s486 = smul.u32 0, 4
    %s487 = smul.addr %s486, 8
    %s488 = scalar_lea.vmem [#allocation2], %s487
    %v489 = vld [vmem:[%s488] sm:$0xff]
    %v490 = vld [vmem:[%s488 + $0x8] sm:$0xff]
    %v491 = vld [vmem:[%s488 + $0x10] sm:$0xff]
    %v492 = vld [vmem:[%s488 + $0x18] sm:$0xff]
    %493 = vmatprep.subr.mxu0 %v421
    %494 = vmatpush1.msra.mxu0 %v420
    %495 = vmatprep.subr.mxu0 %v425
    %496 = vmatpush1.msra.mxu0 %v424
    %497 = vmatprep.subr.mxu0 %v429
    %498 = vmatpush1.msra.mxu0 %v428
    %499 = vmatprep.subr.mxu0 %v433
    %500 = vmatpush1.msra.mxu0 %v432
    %501 = vmatprep.subr.mxu0 %v437
    %502 = vmatpush1.msra.mxu0 %v436
    %503 = vmatprep.subr.mxu0 %v441
    %504 = vmatpush1.msra.mxu0 %v440
    %505 = vmatprep.subr.mxu0 %v445
    %506 = vmatpush1.msra.mxu0 %v444
    %507 = vmatprep.subr.mxu0 %v449
    %508 = vmatpush1.msra.mxu0 %v448
    %509 = vmatprep.subr.mxu0 %v453
    %510 = vmatpush1.msra.mxu0 %v452
    %511 = vmatprep.subr.mxu0 %v457
    %512 = vmatpush1.msra.mxu0 %v456
    %513 = vmatprep.subr.mxu0 %v461
    %514 = vmatpush1.msra.mxu0 %v460
    %515 = vmatprep.subr.mxu0 %v465
    %516 = vmatpush1.msra.mxu0 %v464
    %517 = vmatprep.subr.mxu0 %v469
    %518 = vmatpush1.msra.mxu0 %v468
    %519 = vmatprep.subr.mxu0 %v473
    %520 = vmatpush1.msra.mxu0 %v472
    %521 = vmatprep.subr.mxu0 %v477
    %522 = vmatpush1.msra.mxu0 %v476
    %523 = vmatprep.subr.mxu0 %v481
    %524 = vmatpush1.msra.mxu0 %v480
    %525 = vmatprep.subr.mxu0 0.0
    %526 = vmatpush1.msra.mxu0 0.0
    %527 = vmatprep.subr.mxu0 0.0
    %528 = vmatpush1.msra.mxu0 0.0
    %529 = vmatprep.subr.mxu0 0.0
    %530 = vmatpush1.msra.mxu0 0.0
    %531 = vmatprep.subr.mxu0 0.0
    %532 = vmatpush1.msra.mxu0 0.0
    %533 = vmatprep.subr.mxu0 0.0
    %534 = vmatpush1.msra.mxu0 0.0
    %535 = vmatprep.subr.mxu0 0.0
    %536 = vmatpush1.msra.mxu0 0.0
    %537 = vmatprep.subr.mxu0 0.0
    %538 = vmatpush1.msra.mxu0 0.0
    %539 = vmatprep.subr.mxu0 0.0
    %540 = vmatpush1.msra.mxu0 0.0
    %541 = vmatprep.subr.mxu0 0.0
    %542 = vmatpush1.msra.mxu0 0.0
    %543 = vmatprep.subr.mxu0 0.0
    %544 = vmatpush1.msra.mxu0 0.0
    %545 = vmatprep.subr.mxu0 0.0
    %546 = vmatpush1.msra.mxu0 0.0
    %547 = vmatprep.subr.mxu0 0.0
    %548 = vmatpush1.msra.mxu0 0.0
    %549 = vmatprep.subr.mxu0 0.0
    %550 = vmatpush1.msra.mxu0 0.0
    %551 = vmatprep.subr.mxu0 0.0
    %552 = vmatpush1.msra.mxu0 0.0
    %553 = vmatprep.subr.mxu0 0.0
    %554 = vmatpush1.msra.mxu0 0.0
    %555 = vmatprep.subr.mxu0 0.0
    %556 = vmatpush1.msra.mxu0 0.0
    %557 = vmatprep.mubr.f32.mxu0 0.0
    %558 = vmatmul.mubr.f32.gmra.mrb[0].mxu0 %v484
    %v559 = vpop.f32.mrb[0].mxu0
    %v560 = vadd.f32 0.0, %v559
    %v561 = vpop.f32.mrb[0].mxu0
    %v562 = vadd.f32 0.0, %v561
    %563 = vdwg.mxu0
    %564 = vmatprep.subr.mxu0 %v423
    %565 = vmatpush1.msra.mxu0 %v422
    %566 = vmatprep.subr.mxu0 %v427
    %567 = vmatpush1.msra.mxu0 %v426
    %568 = vmatprep.subr.mxu0 %v431
    %569 = vmatpush1.msra.mxu0 %v430
    %570 = vmatprep.subr.mxu0 %v435
    %571 = vmatpush1.msra.mxu0 %v434
    %572 = vmatprep.subr.mxu0 %v439
    %573 = vmatpush1.msra.mxu0 %v438
    %574 = vmatprep.subr.mxu0 %v443
    %575 = vmatpush1.msra.mxu0 %v442
    %576 = vmatprep.subr.mxu0 %v447
    %577 = vmatpush1.msra.mxu0 %v446
    %578 = vmatprep.subr.mxu0 %v451
    %579 = vmatpush1.msra.mxu0 %v450
    %580 = vmatprep.subr.mxu0 %v455
    %581 = vmatpush1.msra.mxu0 %v454
    %582 = vmatprep.subr.mxu0 %v459
    %583 = vmatpush1.msra.mxu0 %v458
    %584 = vmatprep.subr.mxu0 %v463
    %585 = vmatpush1.msra.mxu0 %v462
    %586 = vmatprep.subr.mxu0 %v467
    %587 = vmatpush1.msra.mxu0 %v466
    %588 = vmatprep.subr.mxu0 %v471
    %589 = vmatpush1.msra.mxu0 %v470
    %590 = vmatprep.subr.mxu0 %v475
    %591 = vmatpush1.msra.mxu0 %v474
    %592 = vmatprep.subr.mxu0 %v479
    %593 = vmatpush1.msra.mxu0 %v478
    %594 = vmatprep.subr.mxu0 %v483
    %595 = vmatpush1.msra.mxu0 %v482
    %596 = vmatprep.subr.mxu0 0.0
    %597 = vmatpush1.msra.mxu0 0.0
    %598 = vmatprep.subr.mxu0 0.0
    %599 = vmatpush1.msra.mxu0 0.0
    %600 = vmatprep.subr.mxu0 0.0
    %601 = vmatpush1.msra.mxu0 0.0
    %602 = vmatprep.subr.mxu0 0.0
    %603 = vmatpush1.msra.mxu0 0.0
    %604 = vmatprep.subr.mxu0 0.0
    %605 = vmatpush1.msra.mxu0 0.0
    %606 = vmatprep.subr.mxu0 0.0
    %607 = vmatpush1.msra.mxu0 0.0
    %608 = vmatprep.subr.mxu0 0.0
    %609 = vmatpush1.msra.mxu0 0.0
    %610 = vmatprep.subr.mxu0 0.0
    %611 = vmatpush1.msra.mxu0 0.0
    %612 = vmatprep.subr.mxu0 0.0
    %613 = vmatpush1.msra.mxu0 0.0
    %614 = vmatprep.subr.mxu0 0.0
    %615 = vmatpush1.msra.mxu0 0.0
    %616 = vmatprep.subr.mxu0 0.0
    %617 = vmatpush1.msra.mxu0 0.0
    %618 = vmatprep.subr.mxu0 0.0
    %619 = vmatpush1.msra.mxu0 0.0
    %620 = vmatprep.subr.mxu0 0.0
    %621 = vmatpush1.msra.mxu0 0.0
    %622 = vmatprep.subr.mxu0 0.0
    %623 = vmatpush1.msra.mxu0 0.0
    %624 = vmatprep.subr.mxu0 0.0
    %625 = vmatpush1.msra.mxu0 0.0
    %626 = vmatprep.subr.mxu0 0.0
    %627 = vmatpush1.msra.mxu0 0.0
    %628 = vmatprep.mubr.f32.mxu0 0.0
    %629 = vmatmul.mubr.f32.gmra.mrb[0].mxu0 %v484
    %v630 = vpop.f32.mrb[0].mxu0
    %v631 = vadd.f32 0.0, %v630
    %v632 = vpop.f32.mrb[0].mxu0
    %v633 = vadd.f32 0.0, %v632
    %634 = vdwg.mxu0
    %v635 = vadd.f32 %v489, %v560
    %v636 = vadd.f32 %v490, %v562
    %v637 = vadd.f32 %v491, %v631
    %v638 = vadd.f32 %v492, %v633
    %v639 = vxor.u32 %v635, 2147483648
    %v640 = vmul.f32 %v639, 1.442695
    %v641 = vpow.pop %v640
    %v642 = vadd.f32 %v641, 1.0
    %v643 = vrcp.pop %v642
    %v644 = vmul.f32 1.0, %v643
    %v645 = vxor.u32 %v636, 2147483648
    %v646 = vmul.f32 %v645, 1.442695
    %v647 = vpow.pop %v646
    %v648 = vadd.f32 %v647, 1.0
    %v649 = vrcp.pop %v648
    %v650 = vmul.f32 1.0, %v649
    %v651 = vtanh.pop %v637
    %v652 = vxor.u32 %v638, 2147483648
    %v653 = vmul.f32 %v652, 1.442695
    %v654 = vpow.pop %v653
    %v655 = vadd.f32 %v654, 1.0
    %v656 = vrcp.pop %v655
    %v657 = vmul.f32 1.0, %v656
    %v658 = vmul.f32 %v650, %v485
    %v659 = vmul.f32 %v644, %v651
    %v660 = vadd.f32 %v658, %v659
    %v661 = vtanh.pop %v660
    %v662 = vmul.f32 %v657, %v661
    %663 = vst [vmem:[#allocation11] sm:$0xff] %v662
    %s664 = smul.u32 1, 4
    %s665 = smul.addr %s664, 8
    %s666 = scalar_lea.vmem [#allocation2], %s665
    %v667 = vld [vmem:[%s666] sm:$0xff]
    %v668 = vld [vmem:[%s666 + $0x8] sm:$0xff]
    %v669 = vld [vmem:[%s666 + $0x10] sm:$0xff]
    %v670 = vld [vmem:[%s666 + $0x18] sm:$0xff]
    %671 = vmatprep.subr.mxu0 %v421
    %672 = vmatpush1.msra.mxu0 %v420
    %673 = vmatprep.subr.mxu0 %v425
    %674 = vmatpush1.msra.mxu0 %v424
    %675 = vmatprep.subr.mxu0 %v429
    %676 = vmatpush1.msra.mxu0 %v428
    %677 = vmatprep.subr.mxu0 %v433
    %678 = vmatpush1.msra.mxu0 %v432
    %679 = vmatprep.subr.mxu0 %v437
    %680 = vmatpush1.msra.mxu0 %v436
    %681 = vmatprep.subr.mxu0 %v441
    %682 = vmatpush1.msra.mxu0 %v440
    %683 = vmatprep.subr.mxu0 %v445
    %684 = vmatpush1.msra.mxu0 %v444
    %685 = vmatprep.subr.mxu0 %v449
    %686 = vmatpush1.msra.mxu0 %v448
    %687 = vmatprep.subr.mxu0 %v453
    %688 = vmatpush1.msra.mxu0 %v452
    %689 = vmatprep.subr.mxu0 %v457
    %690 = vmatpush1.msra.mxu0 %v456
    %691 = vmatprep.subr.mxu0 %v461
    %692 = vmatpush1.msra.mxu0 %v460
    %693 = vmatprep.subr.mxu0 %v465
    %694 = vmatpush1.msra.mxu0 %v464
    %695 = vmatprep.subr.mxu0 %v469
    %696 = vmatpush1.msra.mxu0 %v468
    %697 = vmatprep.subr.mxu0 %v473
    %698 = vmatpush1.msra.mxu0 %v472
    %699 = vmatprep.subr.mxu0 %v477
    %700 = vmatpush1.msra.mxu0 %v476
    %701 = vmatprep.subr.mxu0 %v481
    %702 = vmatpush1.msra.mxu0 %v480
    %703 = vmatprep.subr.mxu0 0.0
    %704 = vmatpush1.msra.mxu0 0.0
    %705 = vmatprep.subr.mxu0 0.0
    %706 = vmatpush1.msra.mxu0 0.0
    %707 = vmatprep.subr.mxu0 0.0
    %708 = vmatpush1.msra.mxu0 0.0
    %709 = vmatprep.subr.mxu0 0.0
    %710 = vmatpush1.msra.mxu0 0.0
    %711 = vmatprep.subr.mxu0 0.0
    %712 = vmatpush1.msra.mxu0 0.0
    %713 = vmatprep.subr.mxu0 0.0
    %714 = vmatpush1.msra.mxu0 0.0
    %715 = vmatprep.subr.mxu0 0.0
    %716 = vmatpush1.msra.mxu0 0.0
    %717 = vmatprep.subr.mxu0 0.0
    %718 = vmatpush1.msra.mxu0 0.0
    %719 = vmatprep.subr.mxu0 0.0
    %720 = vmatpush1.msra.mxu0 0.0
    %721 = vmatprep.subr.mxu0 0.0
    %722 = vmatpush1.msra.mxu0 0.0
    %723 = vmatprep.subr.mxu0 0.0
    %724 = vmatpush1.msra.mxu0 0.0
    %725 = vmatprep.subr.mxu0 0.0
    %726 = vmatpush1.msra.mxu0 0.0
    %727 = vmatprep.subr.mxu0 0.0
    %728 = vmatpush1.msra.mxu0 0.0
    %729 = vmatprep.subr.mxu0 0.0
    %730 = vmatpush1.msra.mxu0 0.0
    %731 = vmatprep.subr.mxu0 0.0
    %732 = vmatpush1.msra.mxu0 0.0
    %733 = vmatprep.subr.mxu0 0.0
    %734 = vmatpush1.msra.mxu0 0.0
    %735 = vmatprep.mubr.f32.mxu0 0.0
    %736 = vmatmul.mubr.f32.gmra.mrb[0].mxu0 %v662
    %v737 = vpop.f32.mrb[0].mxu0
    %v738 = vadd.f32 0.0, %v737
    %v739 = vpop.f32.mrb[0].mxu0
    %v740 = vadd.f32 0.0, %v739
    %741 = vdwg.mxu0
    %742 = vmatprep.subr.mxu0 %v423
    %743 = vmatpush1.msra.mxu0 %v422
    %744 = vmatprep.subr.mxu0 %v427
    %745 = vmatpush1.msra.mxu0 %v426
    %746 = vmatprep.subr.mxu0 %v431
    %747 = vmatpush1.msra.mxu0 %v430
    %748 = vmatprep.subr.mxu0 %v435
    %749 = vmatpush1.msra.mxu0 %v434
    %750 = vmatprep.subr.mxu0 %v439
    %751 = vmatpush1.msra.mxu0 %v438
    %752 = vmatprep.subr.mxu0 %v443
    %753 = vmatpush1.msra.mxu0 %v442
    %754 = vmatprep.subr.mxu0 %v447
    %755 = vmatpush1.msra.mxu0 %v446
    %756 = vmatprep.subr.mxu0 %v451
    %757 = vmatpush1.msra.mxu0 %v450
    %758 = vmatprep.subr.mxu0 %v455
    %759 = vmatpush1.msra.mxu0 %v454
    %760 = vmatprep.subr.mxu0 %v459
    %761 = vmatpush1.msra.mxu0 %v458
    %762 = vmatprep.subr.mxu0 %v463
    %763 = vmatpush1.msra.mxu0 %v462
    %764 = vmatprep.subr.mxu0 %v467
    %765 = vmatpush1.msra.mxu0 %v466
    %766 = vmatprep.subr.mxu0 %v471
    %767 = vmatpush1.msra.mxu0 %v470
    %768 = vmatprep.subr.mxu0 %v475
    %769 = vmatpush1.msra.mxu0 %v474
    %770 = vmatprep.subr.mxu0 %v479
    %771 = vmatpush1.msra.mxu0 %v478
    %772 = vmatprep.subr.mxu0 %v483
    %773 = vmatpush1.msra.mxu0 %v482
    %774 = vmatprep.subr.mxu0 0.0
    %775 = vmatpush1.msra.mxu0 0.0
    %776 = vmatprep.subr.mxu0 0.0
    %777 = vmatpush1.msra.mxu0 0.0
    %778 = vmatprep.subr.mxu0 0.0
    %779 = vmatpush1.msra.mxu0 0.0
    %780 = vmatprep.subr.mxu0 0.0
    %781 = vmatpush1.msra.mxu0 0.0
    %782 = vmatprep.subr.mxu0 0.0
    %783 = vmatpush1.msra.mxu0 0.0
    %784 = vmatprep.subr.mxu0 0.0
    %785 = vmatpush1.msra.mxu0 0.0
    %786 = vmatprep.subr.mxu0 0.0
    %787 = vmatpush1.msra.mxu0 0.0
    %788 = vmatprep.subr.mxu0 0.0
    %789 = vmatpush1.msra.mxu0 0.0
    %790 = vmatprep.subr.mxu0 0.0
    %791 = vmatpush1.msra.mxu0 0.0
    %792 = vmatprep.subr.mxu0 0.0
    %793 = vmatpush1.msra.mxu0 0.0
    %794 = vmatprep.subr.mxu0 0.0
    %795 = vmatpush1.msra.mxu0 0.0
    %796 = vmatprep.subr.mxu0 0.0
    %797 = vmatpush1.msra.mxu0 0.0
    %798 = vmatprep.subr.mxu0 0.0
    %799 = vmatpush1.msra.mxu0 0.0
    %800 = vmatprep.subr.mxu0 0.0
    %801 = vmatpush1.msra.mxu0 0.0
    %802 = vmatprep.subr.mxu0 0.0
    %803 = vmatpush1.msra.mxu0 0.0
    %804 = vmatprep.subr.mxu0 0.0
    %805 = vmatpush1.msra.mxu0 0.0
    %806 = vmatprep.mubr.f32.mxu0 0.0
    %807 = vmatmul.mubr.f32.gmra.mrb[0].mxu0 %v662
    %v808 = vpop.f32.mrb[0].mxu0
    %v809 = vadd.f32 0.0, %v808
    %v810 = vpop.f32.mrb[0].mxu0
    %v811 = vadd.f32 0.0, %v810
    %812 = vdwg.mxu0
    %v813 = vadd.f32 %v667, %v738
    %v814 = vadd.f32 %v668, %v740
    %v815 = vadd.f32 %v669, %v809
    %v816 = vadd.f32 %v670, %v811
    %v817 = vxor.u32 %v813, 2147483648
    %v818 = vmul.f32 %v817, 1.442695
    %v819 = vpow.pop %v818
    %v820 = vadd.f32 %v819, 1.0
    %v821 = vrcp.pop %v820
    %v822 = vmul.f32 1.0, %v821
    %v823 = vxor.u32 %v814, 2147483648
    %v824 = vmul.f32 %v823, 1.442695
    %v825 = vpow.pop %v824
    %v826 = vadd.f32 %v825, 1.0
    %v827 = vrcp.pop %v826
    %v828 = vmul.f32 1.0, %v827
    %v829 = vtanh.pop %v815
    %v830 = vxor.u32 %v816, 2147483648
    %v831 = vmul.f32 %v830, 1.442695
    %v832 = vpow.pop %v831
    %v833 = vadd.f32 %v832, 1.0
    %v834 = vrcp.pop %v833
    %v835 = vmul.f32 1.0, %v834
    %v836 = vmul.f32 %v828, %v660
    %v837 = vmul.f32 %v822, %v829
    %v838 = vadd.f32 %v836, %v837
    %v839 = vtanh.pop %v838
    %v840 = vmul.f32 %v835, %v839
    %s841 = scalar_lea.vmem [#allocation11], 8
    %842 = vst [vmem:[%s841] sm:$0xff] %v840
    %s843 = smul.u32 2, 4
    %s844 = smul.addr %s843, 8
    %s845 = scalar_lea.vmem [#allocation2], %s844
    %v846 = vld [vmem:[%s845] sm:$0xff]
    %v847 = vld [vmem:[%s845 + $0x8] sm:$0xff]
    %v848 = vld [vmem:[%s845 + $0x10] sm:$0xff]
    %v849 = vld [vmem:[%s845 + $0x18] sm:$0xff]
    %850 = vmatprep.subr.mxu0 %v421
    %851 = vmatpush1.msra.mxu0 %v420
    %852 = vmatprep.subr.mxu0 %v425
    %853 = vmatpush1.msra.mxu0 %v424
    %854 = vmatprep.subr.mxu0 %v429
    %855 = vmatpush1.msra.mxu0 %v428
    %856 = vmatprep.subr.mxu0 %v433
    %857 = vmatpush1.msra.mxu0 %v432
    %858 = vmatprep.subr.mxu0 %v437
    %859 = vmatpush1.msra.mxu0 %v436
    %860 = vmatprep.subr.mxu0 %v441
    %861 = vmatpush1.msra.mxu0 %v440
    %862 = vmatprep.subr.mxu0 %v445
    %863 = vmatpush1.msra.mxu0 %v444
    %864 = vmatprep.subr.mxu0 %v449
    %865 = vmatpush1.msra.mxu0 %v448
    %866 = vmatprep.subr.mxu0 %v453
    %867 = vmatpush1.msra.mxu0 %v452
    %868 = vmatprep.subr.mxu0 %v457
    %869 = vmatpush1.msra.mxu0 %v456
    %870 = vmatprep.subr.mxu0 %v461
    %871 = vmatpush1.msra.mxu0 %v460
    %872 = vmatprep.subr.mxu0 %v465
    %873 = vmatpush1.msra.mxu0 %v464
    %874 = vmatprep.subr.mxu0 %v469
    %875 = vmatpush1.msra.mxu0 %v468
    %876 = vmatprep.subr.mxu0 %v473
    %877 = vmatpush1.msra.mxu0 %v472
    %878 = vmatprep.subr.mxu0 %v477
    %879 = vmatpush1.msra.mxu0 %v476
    %880 = vmatprep.subr.mxu0 %v481
    %881 = vmatpush1.msra.mxu0 %v480
    %882 = vmatprep.subr.mxu0 0.0
    %883 = vmatpush1.msra.mxu0 0.0
    %884 = vmatprep.subr.mxu0 0.0
    %885 = vmatpush1.msra.mxu0 0.0
    %886 = vmatprep.subr.mxu0 0.0
    %887 = vmatpush1.msra.mxu0 0.0
    %888 = vmatprep.subr.mxu0 0.0
    %889 = vmatpush1.msra.mxu0 0.0
    %890 = vmatprep.subr.mxu0 0.0
    %891 = vmatpush1.msra.mxu0 0.0
    %892 = vmatprep.subr.mxu0 0.0
    %893 = vmatpush1.msra.mxu0 0.0
    %894 = vmatprep.subr.mxu0 0.0
    %895 = vmatpush1.msra.mxu0 0.0
    %896 = vmatprep.subr.mxu0 0.0
    %897 = vmatpush1.msra.mxu0 0.0
    %898 = vmatprep.subr.mxu0 0.0
    %899 = vmatpush1.msra.mxu0 0.0
    %900 = vmatprep.subr.mxu0 0.0
    %901 = vmatpush1.msra.mxu0 0.0
    %902 = vmatprep.subr.mxu0 0.0
    %903 = vmatpush1.msra.mxu0 0.0
    %904 = vmatprep.subr.mxu0 0.0
    %905 = vmatpush1.msra.mxu0 0.0
    %906 = vmatprep.subr.mxu0 0.0
    %907 = vmatpush1.msra.mxu0 0.0
    %908 = vmatprep.subr.mxu0 0.0
    %909 = vmatpush1.msra.mxu0 0.0
    %910 = vmatprep.subr.mxu0 0.0
    %911 = vmatpush1.msra.mxu0 0.0
    %912 = vmatprep.subr.mxu0 0.0
    %913 = vmatpush1.msra.mxu0 0.0
    %914 = vmatprep.mubr.f32.mxu0 0.0
    %915 = vmatmul.mubr.f32.gmra.mrb[0].mxu0 %v840
    %v916 = vpop.f32.mrb[0].mxu0
    %v917 = vadd.f32 0.0, %v916
    %v918 = vpop.f32.mrb[0].mxu0
    %v919 = vadd.f32 0.0, %v918
    %920 = vdwg.mxu0
    %921 = vmatprep.subr.mxu0 %v423
    %922 = vmatpush1.msra.mxu0 %v422
    %923 = vmatprep.subr.mxu0 %v427
    %924 = vmatpush1.msra.mxu0 %v426
    %925 = vmatprep.subr.mxu0 %v431
    %926 = vmatpush1.msra.mxu0 %v430
    %927 = vmatprep.subr.mxu0 %v435
    %928 = vmatpush1.msra.mxu0 %v434
    %929 = vmatprep.subr.mxu0 %v439
    %930 = vmatpush1.msra.mxu0 %v438
    %931 = vmatprep.subr.mxu0 %v443
    %932 = vmatpush1.msra.mxu0 %v442
    %933 = vmatprep.subr.mxu0 %v447
    %934 = vmatpush1.msra.mxu0 %v446
    %935 = vmatprep.subr.mxu0 %v451
    %936 = vmatpush1.msra.mxu0 %v450
    %937 = vmatprep.subr.mxu0 %v455
    %938 = vmatpush1.msra.mxu0 %v454
    %939 = vmatprep.subr.mxu0 %v459
    %940 = vmatpush1.msra.mxu0 %v458
    %941 = vmatprep.subr.mxu0 %v463
    %942 = vmatpush1.msra.mxu0 %v462
    %943 = vmatprep.subr.mxu0 %v467
    %944 = vmatpush1.msra.mxu0 %v466
    %945 = vmatprep.subr.mxu0 %v471
    %946 = vmatpush1.msra.mxu0 %v470
    %947 = vmatprep.subr.mxu0 %v475
    %948 = vmatpush1.msra.mxu0 %v474
    %949 = vmatprep.subr.mxu0 %v479
    %950 = vmatpush1.msra.mxu0 %v478
    %951 = vmatprep.subr.mxu0 %v483
    %952 = vmatpush1.msra.mxu0 %v482
    %953 = vmatprep.subr.mxu0 0.0
    %954 = vmatpush1.msra.mxu0 0.0
    %955 = vmatprep.subr.mxu0 0.0
    %956 = vmatpush1.msra.mxu0 0.0
    %957 = vmatprep.subr.mxu0 0.0
    %958 = vmatpush1.msra.mxu0 0.0
    %959 = vmatprep.subr.mxu0 0.0
    %960 = vmatpush1.msra.mxu0 0.0
    %961 = vmatprep.subr.mxu0 0.0
    %962 = vmatpush1.msra.mxu0 0.0
    %963 = vmatprep.subr.mxu0 0.0
    %964 = vmatpush1.msra.mxu0 0.0
    %965 = vmatprep.subr.mxu0 0.0
    %966 = vmatpush1.msra.mxu0 0.0
    %967 = vmatprep.subr.mxu0 0.0
    %968 = vmatpush1.msra.mxu0 0.0
    %969 = vmatprep.subr.mxu0 0.0
    %970 = vmatpush1.msra.mxu0 0.0
    %971 = vmatprep.subr.mxu0 0.0
    %972 = vmatpush1.msra.mxu0 0.0
    %973 = vmatprep.subr.mxu0 0.0
    %974 = vmatpush1.msra.mxu0 0.0
    %975 = vmatprep.subr.mxu0 0.0
    %976 = vmatpush1.msra.mxu0 0.0
    %977 = vmatprep.subr.mxu0 0.0
    %978 = vmatpush1.msra.mxu0 0.0
    %979 = vmatprep.subr.mxu0 0.0
    %980 = vmatpush1.msra.mxu0 0.0
    %981 = vmatprep.subr.mxu0 0.0
    %982 = vmatpush1.msra.mxu0 0.0
    %983 = vmatprep.subr.mxu0 0.0
    %984 = vmatpush1.msra.mxu0 0.0
    %985 = vmatprep.mubr.f32.mxu0 0.0
    %986 = vmatmul.mubr.f32.gmra.mrb[0].mxu0 %v840
    %v987 = vpop.f32.mrb[0].mxu0
    %v988 = vadd.f32 0.0, %v987
    %v989 = vpop.f32.mrb[0].mxu0
    %v990 = vadd.f32 0.0, %v989
    %991 = vdwg.mxu0
    %v992 = vadd.f32 %v846, %v917
    %v993 = vadd.f32 %v847, %v919
    %v994 = vadd.f32 %v848, %v988
    %v995 = vadd.f32 %v849, %v990
    %v996 = vxor.u32 %v992, 2147483648
    %v997 = vmul.f32 %v996, 1.442695
    %v998 = vpow.pop %v997
    %v999 = vadd.f32 %v998, 1.0
    %v1000 = vrcp.pop %v999
    %v1001 = vmul.f32 1.0, %v1000
    %v1002 = vxor.u32 %v993, 2147483648
    %v1003 = vmul.f32 %v1002, 1.442695
    %v1004 = vpow.pop %v1003
    %v1005 = vadd.f32 %v1004, 1.0
    %v1006 = vrcp.pop %v1005
    %v1007 = vmul.f32 1.0, %v1006
    %v1008 = vtanh.pop %v994
    %v1009 = vxor.u32 %v995, 2147483648
    %v1010 = vmul.f32 %v1009, 1.442695
    %v1011 = vpow.pop %v1010
    %v1012 = vadd.f32 %v1011, 1.0
    %v1013 = vrcp.pop %v1012
    %v1014 = vmul.f32 1.0, %v1013
    %v1015 = vmul.f32 %v1007, %v838
    %v1016 = vmul.f32 %v1001, %v1008
    %v1017 = vadd.f32 %v1015, %v1016
    %v1018 = vtanh.pop %v1017
    %v1019 = vmul.f32 %v1014, %v1018
    %s1020 = scalar_lea.vmem [#allocation11], 16
    %1021 = vst [vmem:[%s1020] sm:$0xff] %v1019
    %s1022 = smul.u32 3, 4
    %s1023 = smul.addr %s1022, 8
    %s1024 = scalar_lea.vmem [#allocation2], %s1023
    %v1025 = vld [vmem:[%s1024] sm:$0xff]
    %v1026 = vld [vmem:[%s1024 + $0x8] sm:$0xff]
    %v1027 = vld [vmem:[%s1024 + $0x10] sm:$0xff]
    %v1028 = vld [vmem:[%s1024 + $0x18] sm:$0xff]
    %1029 = vmatprep.subr.mxu0 %v421
    %1030 = vmatpush1.msra.mxu0 %v420
    %1031 = vmatprep.subr.mxu0 %v425
    %1032 = vmatpush1.msra.mxu0 %v424
    %1033 = vmatprep.subr.mxu0 %v429
    %1034 = vmatpush1.msra.mxu0 %v428
    %1035 = vmatprep.subr.mxu0 %v433
    %1036 = vmatpush1.msra.mxu0 %v432
    %1037 = vmatprep.subr.mxu0 %v437
    %1038 = vmatpush1.msra.mxu0 %v436
    %1039 = vmatprep.subr.mxu0 %v441
    %1040 = vmatpush1.msra.mxu0 %v440
    %1041 = vmatprep.subr.mxu0 %v445
    %1042 = vmatpush1.msra.mxu0 %v444
    %1043 = vmatprep.subr.mxu0 %v449
    %1044 = vmatpush1.msra.mxu0 %v448
    %1045 = vmatprep.subr.mxu0 %v453
    %1046 = vmatpush1.msra.mxu0 %v452
    %1047 = vmatprep.subr.mxu0 %v457
    %1048 = vmatpush1.msra.mxu0 %v456
    %1049 = vmatprep.subr.mxu0 %v461
    %1050 = vmatpush1.msra.mxu0 %v460
    %1051 = vmatprep.subr.mxu0 %v465
    %1052 = vmatpush1.msra.mxu0 %v464
    %1053 = vmatprep.subr.mxu0 %v469
    %1054 = vmatpush1.msra.mxu0 %v468
    %1055 = vmatprep.subr.mxu0 %v473
    %1056 = vmatpush1.msra.mxu0 %v472
    %1057 = vmatprep.subr.mxu0 %v477
    %1058 = vmatpush1.msra.mxu0 %v476
    %1059 = vmatprep.subr.mxu0 %v481
    %1060 = vmatpush1.msra.mxu0 %v480
    %1061 = vmatprep.subr.mxu0 0.0
    %1062 = vmatpush1.msra.mxu0 0.0
    %1063 = vmatprep.subr.mxu0 0.0
    %1064 = vmatpush1.msra.mxu0 0.0
    %1065 = vmatprep.subr.mxu0 0.0
    %1066 = vmatpush1.msra.mxu0 0.0
    %1067 = vmatprep.subr.mxu0 0.0
    %1068 = vmatpush1.msra.mxu0 0.0
    %1069 = vmatprep.subr.mxu0 0.0
    %1070 = vmatpush1.msra.mxu0 0.0
    %1071 = vmatprep.subr.mxu0 0.0
    %1072 = vmatpush1.msra.mxu0 0.0
    %1073 = vmatprep.subr.mxu0 0.0
    %1074 = vmatpush1.msra.mxu0 0.0
    %1075 = vmatprep.subr.mxu0 0.0
    %1076 = vmatpush1.msra.mxu0 0.0
    %1077 = vmatprep.subr.mxu0 0.0
    %1078 = vmatpush1.msra.mxu0 0.0
    %1079 = vmatprep.subr.mxu0 0.0
    %1080 = vmatpush1.msra.mxu0 0.0
    %1081 = vmatprep.subr.mxu0 0.0
    %1082 = vmatpush1.msra.mxu0 0.0
    %1083 = vmatprep.subr.mxu0 0.0
    %1084 = vmatpush1.msra.mxu0 0.0
    %1085 = vmatprep.subr.mxu0 0.0
    %1086 = vmatpush1.msra.mxu0 0.0
    %1087 = vmatprep.subr.mxu0 0.0
    %1088 = vmatpush1.msra.mxu0 0.0
    %1089 = vmatprep.subr.mxu0 0.0
    %1090 = vmatpush1.msra.mxu0 0.0
    %1091 = vmatprep.subr.mxu0 0.0
    %1092 = vmatpush1.msra.mxu0 0.0
    %1093 = vmatprep.mubr.f32.mxu0 0.0
    %1094 = vmatmul.mubr.f32.gmra.mrb[0].mxu0 %v1019
    %v1095 = vpop.f32.mrb[0].mxu0
    %v1096 = vadd.f32 0.0, %v1095
    %v1097 = vpop.f32.mrb[0].mxu0
    %v1098 = vadd.f32 0.0, %v1097
    %1099 = vdwg.mxu0
    %1100 = vmatprep.subr.mxu0 %v423
    %1101 = vmatpush1.msra.mxu0 %v422
    %1102 = vmatprep.subr.mxu0 %v427
    %1103 = vmatpush1.msra.mxu0 %v426
    %1104 = vmatprep.subr.mxu0 %v431
    %1105 = vmatpush1.msra.mxu0 %v430
    %1106 = vmatprep.subr.mxu0 %v435
    %1107 = vmatpush1.msra.mxu0 %v434
    %1108 = vmatprep.subr.mxu0 %v439
    %1109 = vmatpush1.msra.mxu0 %v438
    %1110 = vmatprep.subr.mxu0 %v443
    %1111 = vmatpush1.msra.mxu0 %v442
    %1112 = vmatprep.subr.mxu0 %v447
    %1113 = vmatpush1.msra.mxu0 %v446
    %1114 = vmatprep.subr.mxu0 %v451
    %1115 = vmatpush1.msra.mxu0 %v450
    %1116 = vmatprep.subr.mxu0 %v455
    %1117 = vmatpush1.msra.mxu0 %v454
    %1118 = vmatprep.subr.mxu0 %v459
    %1119 = vmatpush1.msra.mxu0 %v458
    %1120 = vmatprep.subr.mxu0 %v463
    %1121 = vmatpush1.msra.mxu0 %v462
    %1122 = vmatprep.subr.mxu0 %v467
    %1123 = vmatpush1.msra.mxu0 %v466
    %1124 = vmatprep.subr.mxu0 %v471
    %1125 = vmatpush1.msra.mxu0 %v470
    %1126 = vmatprep.subr.mxu0 %v475
    %1127 = vmatpush1.msra.mxu0 %v474
    %1128 = vmatprep.subr.mxu0 %v479
    %1129 = vmatpush1.msra.mxu0 %v478
    %1130 = vmatprep.subr.mxu0 %v483
    %1131 = vmatpush1.msra.mxu0 %v482
    %1132 = vmatprep.subr.mxu0 0.0
    %1133 = vmatpush1.msra.mxu0 0.0
    %1134 = vmatprep.subr.mxu0 0.0
    %1135 = vmatpush1.msra.mxu0 0.0
    %1136 = vmatprep.subr.mxu0 0.0
    %1137 = vmatpush1.msra.mxu0 0.0
    %1138 = vmatprep.subr.mxu0 0.0
    %1139 = vmatpush1.msra.mxu0 0.0
    %1140 = vmatprep.subr.mxu0 0.0
    %1141 = vmatpush1.msra.mxu0 0.0
    %1142 = vmatprep.subr.mxu0 0.0
    %1143 = vmatpush1.msra.mxu0 0.0
    %1144 = vmatprep.subr.mxu0 0.0
    %1145 = vmatpush1.msra.mxu0 0.0
    %1146 = vmatprep.subr.mxu0 0.0
    %1147 = vmatpush1.msra.mxu0 0.0
    %1148 = vmatprep.subr.mxu0 0.0
    %1149 = vmatpush1.msra.mxu0 0.0
    %1150 = vmatprep.subr.mxu0 0.0
    %1151 = vmatpush1.msra.mxu0 0.0
    %1152 = vmatprep.subr.mxu0 0.0
    %1153 = vmatpush1.msra.mxu0 0.0
    %1154 = vmatprep.subr.mxu0 0.0
    %1155 = vmatpush1.msra.mxu0 0.0
    %1156 = vmatprep.subr.mxu0 0.0
    %1157 = vmatpush1.msra.mxu0 0.0
    %1158 = vmatprep.subr.mxu0 0.0
    %1159 = vmatpush1.msra.mxu0 0.0
    %1160 = vmatprep.subr.mxu0 0.0
    %1161 = vmatpush1.msra.mxu0 0.0
    %1162 = vmatprep.subr.mxu0 0.0
    %1163 = vmatpush1.msra.mxu0 0.0
    %1164 = vmatprep.mubr.f32.mxu0 0.0
    %1165 = vmatmul.mubr.f32.gmra.mrb[0].mxu0 %v1019
    %v1166 = vpop.f32.mrb[0].mxu0
    %v1167 = vadd.f32 0.0, %v1166
    %v1168 = vpop.f32.mrb[0].mxu0
    %v1169 = vadd.f32 0.0, %v1168
    %1170 = vdwg.mxu0
    %v1171 = vadd.f32 %v1025, %v1096
    %v1172 = vadd.f32 %v1026, %v1098
    %v1173 = vadd.f32 %v1027, %v1167
    %v1174 = vadd.f32 %v1028, %v1169
    %v1175 = vxor.u32 %v1171, 2147483648
    %v1176 = vmul.f32 %v1175, 1.442695
    %v1177 = vpow.pop %v1176
    %v1178 = vadd.f32 %v1177, 1.0
    %v1179 = vrcp.pop %v1178
    %v1180 = vmul.f32 1.0, %v1179
    %v1181 = vxor.u32 %v1172, 2147483648
    %v1182 = vmul.f32 %v1181, 1.442695
    %v1183 = vpow.pop %v1182
    %v1184 = vadd.f32 %v1183, 1.0
    %v1185 = vrcp.pop %v1184
    %v1186 = vmul.f32 1.0, %v1185
    %v1187 = vtanh.pop %v1173
    %v1188 = vxor.u32 %v1174, 2147483648
    %v1189 = vmul.f32 %v1188, 1.442695
    %v1190 = vpow.pop %v1189
    %v1191 = vadd.f32 %v1190, 1.0
    %v1192 = vrcp.pop %v1191
    %v1193 = vmul.f32 1.0, %v1192
    %v1194 = vmul.f32 %v1186, %v1017
    %v1195 = vmul.f32 %v1180, %v1187
    %v1196 = vadd.f32 %v1194, %v1195
    %v1197 = vtanh.pop %v1196
    %v1198 = vmul.f32 %v1193, %v1197
    %s1199 = scalar_lea.vmem [#allocation11], 24
    %1200 = vst [vmem:[%s1199] sm:$0xff] %v1198
    %s1201 = smul.u32 4, 4
    %s1202 = smul.addr %s1201, 8
    %s1203 = scalar_lea.vmem [#allocation2], %s1202
    %v1204 = vld [vmem:[%s1203] sm:$0xff]
    %v1205 = vld [vmem:[%s1203 + $0x8] sm:$0xff]
    %v1206 = vld [vmem:[%s1203 + $0x10] sm:$0xff]
    %v1207 = vld [vmem:[%s1203 + $0x18] sm:$0xff]
    %1208 = vmatprep.subr.mxu0 %v421
    %1209 = vmatpush1.msra.mxu0 %v420
    %1210 = vmatprep.subr.mxu0 %v425
    %1211 = vmatpush1.msra.mxu0 %v424
    %1212 = vmatprep.subr.mxu0 %v429
    %1213 = vmatpush1.msra.mxu0 %v428
    %1214 = vmatprep.subr.mxu0 %v433
    %1215 = vmatpush1.msra.mxu0 %v432
    %1216 = vmatprep.subr.mxu0 %v437
    %1217 = vmatpush1.msra.mxu0 %v436
    %1218 = vmatprep.subr.mxu0 %v441
    %1219 = vmatpush1.msra.mxu0 %v440
    %1220 = vmatprep.subr.mxu0 %v445
    %1221 = vmatpush1.msra.mxu0 %v444
    %1222 = vmatprep.subr.mxu0 %v449
    %1223 = vmatpush1.msra.mxu0 %v448
    %1224 = vmatprep.subr.mxu0 %v453
    %1225 = vmatpush1.msra.mxu0 %v452
    %1226 = vmatprep.subr.mxu0 %v457
    %1227 = vmatpush1.msra.mxu0 %v456
    %1228 = vmatprep.subr.mxu0 %v461
    %1229 = vmatpush1.msra.mxu0 %v460
    %1230 = vmatprep.subr.mxu0 %v465
    %1231 = vmatpush1.msra.mxu0 %v464
    %1232 = vmatprep.subr.mxu0 %v469
    %1233 = vmatpush1.msra.mxu0 %v468
    %1234 = vmatprep.subr.mxu0 %v473
    %1235 = vmatpush1.msra.mxu0 %v472
    %1236 = vmatprep.subr.mxu0 %v477
    %1237 = vmatpush1.msra.mxu0 %v476
    %1238 = vmatprep.subr.mxu0 %v481
    %1239 = vmatpush1.msra.mxu0 %v480
    %1240 = vmatprep.subr.mxu0 0.0
    %1241 = vmatpush1.msra.mxu0 0.0
    %1242 = vmatprep.subr.mxu0 0.0
    %1243 = vmatpush1.msra.mxu0 0.0
    %1244 = vmatprep.subr.mxu0 0.0
    %1245 = vmatpush1.msra.mxu0 0.0
    %1246 = vmatprep.subr.mxu0 0.0
    %1247 = vmatpush1.msra.mxu0 0.0
    %1248 = vmatprep.subr.mxu0 0.0
    %1249 = vmatpush1.msra.mxu0 0.0
    %1250 = vmatprep.subr.mxu0 0.0
    %1251 = vmatpush1.msra.mxu0 0.0
    %1252 = vmatprep.subr.mxu0 0.0
    %1253 = vmatpush1.msra.mxu0 0.0
    %1254 = vmatprep.subr.mxu0 0.0
    %1255 = vmatpush1.msra.mxu0 0.0
    %1256 = vmatprep.subr.mxu0 0.0
    %1257 = vmatpush1.msra.mxu0 0.0
    %1258 = vmatprep.subr.mxu0 0.0
    %1259 = vmatpush1.msra.mxu0 0.0
    %1260 = vmatprep.subr.mxu0 0.0
    %1261 = vmatpush1.msra.mxu0 0.0
    %1262 = vmatprep.subr.mxu0 0.0
    %1263 = vmatpush1.msra.mxu0 0.0
    %1264 = vmatprep.subr.mxu0 0.0
    %1265 = vmatpush1.msra.mxu0 0.0
    %1266 = vmatprep.subr.mxu0 0.0
    %1267 = vmatpush1.msra.mxu0 0.0
    %1268 = vmatprep.subr.mxu0 0.0
    %1269 = vmatpush1.msra.mxu0 0.0
    %1270 = vmatprep.subr.mxu0 0.0
    %1271 = vmatpush1.msra.mxu0 0.0
    %1272 = vmatprep.mubr.f32.mxu0 0.0
    %1273 = vmatmul.mubr.f32.gmra.mrb[0].mxu0 %v1198
    %v1274 = vpop.f32.mrb[0].mxu0
    %v1275 = vadd.f32 0.0, %v1274
    %v1276 = vpop.f32.mrb[0].mxu0
    %v1277 = vadd.f32 0.0, %v1276
    %1278 = vdwg.mxu0
    %1279 = vmatprep.subr.mxu0 %v423
    %1280 = vmatpush1.msra.mxu0 %v422
    %1281 = vmatprep.subr.mxu0 %v427
    %1282 = vmatpush1.msra.mxu0 %v426
    %1283 = vmatprep.subr.mxu0 %v431
    %1284 = vmatpush1.msra.mxu0 %v430
    %1285 = vmatprep.subr.mxu0 %v435
    %1286 = vmatpush1.msra.mxu0 %v434
    %1287 = vmatprep.subr.mxu0 %v439
    %1288 = vmatpush1.msra.mxu0 %v438
    %1289 = vmatprep.subr.mxu0 %v443
    %1290 = vmatpush1.msra.mxu0 %v442
    %1291 = vmatprep.subr.mxu0 %v447
    %1292 = vmatpush1.msra.mxu0 %v446
    %1293 = vmatprep.subr.mxu0 %v451
    %1294 = vmatpush1.msra.mxu0 %v450
    %1295 = vmatprep.subr.mxu0 %v455
    %1296 = vmatpush1.msra.mxu0 %v454
    %1297 = vmatprep.subr.mxu0 %v459
    %1298 = vmatpush1.msra.mxu0 %v458
    %1299 = vmatprep.subr.mxu0 %v463
    %1300 = vmatpush1.msra.mxu0 %v462
    %1301 = vmatprep.subr.mxu0 %v467
    %1302 = vmatpush1.msra.mxu0 %v466
    %1303 = vmatprep.subr.mxu0 %v471
    %1304 = vmatpush1.msra.mxu0 %v470
    %1305 = vmatprep.subr.mxu0 %v475
    %1306 = vmatpush1.msra.mxu0 %v474
    %1307 = vmatprep.subr.mxu0 %v479
    %1308 = vmatpush1.msra.mxu0 %v478
    %1309 = vmatprep.subr.mxu0 %v483
    %1310 = vmatpush1.msra.mxu0 %v482
    %1311 = vmatprep.subr.mxu0 0.0
    %1312 = vmatpush1.msra.mxu0 0.0
    %1313 = vmatprep.subr.mxu0 0.0
    %1314 = vmatpush1.msra.mxu0 0.0
    %1315 = vmatprep.subr.mxu0 0.0
    %1316 = vmatpush1.msra.mxu0 0.0
    %1317 = vmatprep.subr.mxu0 0.0
    %1318 = vmatpush1.msra.mxu0 0.0
    %1319 = vmatprep.subr.mxu0 0.0
    %1320 = vmatpush1.msra.mxu0 0.0
    %1321 = vmatprep.subr.mxu0 0.0
    %1322 = vmatpush1.msra.mxu0 0.0
    %1323 = vmatprep.subr.mxu0 0.0
    %1324 = vmatpush1.msra.mxu0 0.0
    %1325 = vmatprep.subr.mxu0 0.0
    %1326 = vmatpush1.msra.mxu0 0.0
    %1327 = vmatprep.subr.mxu0 0.0
    %1328 = vmatpush1.msra.mxu0 0.0
    %1329 = vmatprep.subr.mxu0 0.0
    %1330 = vmatpush1.msra.mxu0 0.0
    %1331 = vmatprep.subr.mxu0 0.0
    %1332 = vmatpush1.msra.mxu0 0.0
    %1333 = vmatprep.subr.mxu0 0.0
    %1334 = vmatpush1.msra.mxu0 0.0
    %1335 = vmatprep.subr.mxu0 0.0
    %1336 = vmatpush1.msra.mxu0 0.0
    %1337 = vmatprep.subr.mxu0 0.0
    %1338 = vmatpush1.msra.mxu0 0.0
    %1339 = vmatprep.subr.mxu0 0.0
    %1340 = vmatpush1.msra.mxu0 0.0
    %1341 = vmatprep.subr.mxu0 0.0
    %1342 = vmatpush1.msra.mxu0 0.0
    %1343 = vmatprep.mubr.f32.mxu0 0.0
    %1344 = vmatmul.mubr.f32.gmra.mrb[0].mxu0 %v1198
    %v1345 = vpop.f32.mrb[0].mxu0
    %v1346 = vadd.f32 0.0, %v1345
    %v1347 = vpop.f32.mrb[0].mxu0
    %v1348 = vadd.f32 0.0, %v1347
    %1349 = vdwg.mxu0
    %v1350 = vadd.f32 %v1204, %v1275
    %v1351 = vadd.f32 %v1205, %v1277
    %v1352 = vadd.f32 %v1206, %v1346
    %v1353 = vadd.f32 %v1207, %v1348
    %v1354 = vxor.u32 %v1350, 2147483648
    %v1355 = vmul.f32 %v1354, 1.442695
    %v1356 = vpow.pop %v1355
    %v1357 = vadd.f32 %v1356, 1.0
    %v1358 = vrcp.pop %v1357
    %v1359 = vmul.f32 1.0, %v1358
    %v1360 = vxor.u32 %v1351, 2147483648
    %v1361 = vmul.f32 %v1360, 1.442695
    %v1362 = vpow.pop %v1361
    %v1363 = vadd.f32 %v1362, 1.0
    %v1364 = vrcp.pop %v1363
    %v1365 = vmul.f32 1.0, %v1364
    %v1366 = vtanh.pop %v1352
    %v1367 = vxor.u32 %v1353, 2147483648
    %v1368 = vmul.f32 %v1367, 1.442695
    %v1369 = vpow.pop %v1368
    %v1370 = vadd.f32 %v1369, 1.0
    %v1371 = vrcp.pop %v1370
    %v1372 = vmul.f32 1.0, %v1371
    %v1373 = vmul.f32 %v1365, %v1196
    %v1374 = vmul.f32 %v1359, %v1366
    %v1375 = vadd.f32 %v1373, %v1374
    %v1376 = vtanh.pop %v1375
    %v1377 = vmul.f32 %v1372, %v1376
    %s1378 = scalar_lea.vmem [#allocation11], 32
    %1379 = vst [vmem:[%s1378] sm:$0xff] %v1377
    %s1380 = smul.u32 5, 4
    %s1381 = smul.addr %s1380, 8
    %s1382 = scalar_lea.vmem [#allocation2], %s1381
    %v1383 = vld [vmem:[%s1382] sm:$0xff]
    %v1384 = vld [vmem:[%s1382 + $0x8] sm:$0xff]
    %v1385 = vld [vmem:[%s1382 + $0x10] sm:$0xff]
    %v1386 = vld [vmem:[%s1382 + $0x18] sm:$0xff]
    %1387 = vmatprep.subr.mxu0 %v421
    %1388 = vmatpush1.msra.mxu0 %v420
    %1389 = vmatprep.subr.mxu0 %v425
    %1390 = vmatpush1.msra.mxu0 %v424
    %1391 = vmatprep.subr.mxu0 %v429
    %1392 = vmatpush1.msra.mxu0 %v428
    %1393 = vmatprep.subr.mxu0 %v433
    %1394 = vmatpush1.msra.mxu0 %v432
    %1395 = vmatprep.subr.mxu0 %v437
    %1396 = vmatpush1.msra.mxu0 %v436
    %1397 = vmatprep.subr.mxu0 %v441
    %1398 = vmatpush1.msra.mxu0 %v440
    %1399 = vmatprep.subr.mxu0 %v445
    %1400 = vmatpush1.msra.mxu0 %v444
    %1401 = vmatprep.subr.mxu0 %v449
    %1402 = vmatpush1.msra.mxu0 %v448
    %1403 = vmatprep.subr.mxu0 %v453
    %1404 = vmatpush1.msra.mxu0 %v452
    %1405 = vmatprep.subr.mxu0 %v457
    %1406 = vmatpush1.msra.mxu0 %v456
    %1407 = vmatprep.subr.mxu0 %v461
    %1408 = vmatpush1.msra.mxu0 %v460
    %1409 = vmatprep.subr.mxu0 %v465
    %1410 = vmatpush1.msra.mxu0 %v464
    %1411 = vmatprep.subr.mxu0 %v469
    %1412 = vmatpush1.msra.mxu0 %v468
    %1413 = vmatprep.subr.mxu0 %v473
    %1414 = vmatpush1.msra.mxu0 %v472
    %1415 = vmatprep.subr.mxu0 %v477
    %1416 = vmatpush1.msra.mxu0 %v476
    %1417 = vmatprep.subr.mxu0 %v481
    %1418 = vmatpush1.msra.mxu0 %v480
    %1419 = vmatprep.subr.mxu0 0.0
    %1420 = vmatpush1.msra.mxu0 0.0
    %1421 = vmatprep.subr.mxu0 0.0
    %1422 = vmatpush1.msra.mxu0 0.0
    %1423 = vmatprep.subr.mxu0 0.0
    %1424 = vmatpush1.msra.mxu0 0.0
    %1425 = vmatprep.subr.mxu0 0.0
    %1426 = vmatpush1.msra.mxu0 0.0
    %1427 = vmatprep.subr.mxu0 0.0
    %1428 = vmatpush1.msra.mxu0 0.0
    %1429 = vmatprep.subr.mxu0 0.0
    %1430 = vmatpush1.msra.mxu0 0.0
    %1431 = vmatprep.subr.mxu0 0.0
    %1432 = vmatpush1.msra.mxu0 0.0
    %1433 = vmatprep.subr.mxu0 0.0
    %1434 = vmatpush1.msra.mxu0 0.0
    %1435 = vmatprep.subr.mxu0 0.0
    %1436 = vmatpush1.msra.mxu0 0.0
    %1437 = vmatprep.subr.mxu0 0.0
    %1438 = vmatpush1.msra.mxu0 0.0
    %1439 = vmatprep.subr.mxu0 0.0
    %1440 = vmatpush1.msra.mxu0 0.0
    %1441 = vmatprep.subr.mxu0 0.0
    %1442 = vmatpush1.msra.mxu0 0.0
    %1443 = vmatprep.subr.mxu0 0.0
    %1444 = vmatpush1.msra.mxu0 0.0
    %1445 = vmatprep.subr.mxu0 0.0
    %1446 = vmatpush1.msra.mxu0 0.0
    %1447 = vmatprep.subr.mxu0 0.0
    %1448 = vmatpush1.msra.mxu0 0.0
    %1449 = vmatprep.subr.mxu0 0.0
    %1450 = vmatpush1.msra.mxu0 0.0
    %1451 = vmatprep.mubr.f32.mxu0 0.0
    %1452 = vmatmul.mubr.f32.gmra.mrb[0].mxu0 %v1377
    %v1453 = vpop.f32.mrb[0].mxu0
    %v1454 = vadd.f32 0.0, %v1453
    %v1455 = vpop.f32.mrb[0].mxu0
    %v1456 = vadd.f32 0.0, %v1455
    %1457 = vdwg.mxu0
    %1458 = vmatprep.subr.mxu0 %v423
    %1459 = vmatpush1.msra.mxu0 %v422
    %1460 = vmatprep.subr.mxu0 %v427
    %1461 = vmatpush1.msra.mxu0 %v426
    %1462 = vmatprep.subr.mxu0 %v431
    %1463 = vmatpush1.msra.mxu0 %v430
    %1464 = vmatprep.subr.mxu0 %v435
    %1465 = vmatpush1.msra.mxu0 %v434
    %1466 = vmatprep.subr.mxu0 %v439
    %1467 = vmatpush1.msra.mxu0 %v438
    %1468 = vmatprep.subr.mxu0 %v443
    %1469 = vmatpush1.msra.mxu0 %v442
    %1470 = vmatprep.subr.mxu0 %v447
    %1471 = vmatpush1.msra.mxu0 %v446
    %1472 = vmatprep.subr.mxu0 %v451
    %1473 = vmatpush1.msra.mxu0 %v450
    %1474 = vmatprep.subr.mxu0 %v455
    %1475 = vmatpush1.msra.mxu0 %v454
    %1476 = vmatprep.subr.mxu0 %v459
    %1477 = vmatpush1.msra.mxu0 %v458
    %1478 = vmatprep.subr.mxu0 %v463
    %1479 = vmatpush1.msra.mxu0 %v462
    %1480 = vmatprep.subr.mxu0 %v467
    %1481 = vmatpush1.msra.mxu0 %v466
    %1482 = vmatprep.subr.mxu0 %v471
    %1483 = vmatpush1.msra.mxu0 %v470
    %1484 = vmatprep.subr.mxu0 %v475
    %1485 = vmatpush1.msra.mxu0 %v474
    %1486 = vmatprep.subr.mxu0 %v479
    %1487 = vmatpush1.msra.mxu0 %v478
    %1488 = vmatprep.subr.mxu0 %v483
    %1489 = vmatpush1.msra.mxu0 %v482
    %1490 = vmatprep.subr.mxu0 0.0
    %1491 = vmatpush1.msra.mxu0 0.0
    %1492 = vmatprep.subr.mxu0 0.0
    %1493 = vmatpush1.msra.mxu0 0.0
    %1494 = vmatprep.subr.mxu0 0.0
    %1495 = vmatpush1.msra.mxu0 0.0
    %1496 = vmatprep.subr.mxu0 0.0
    %1497 = vmatpush1.msra.mxu0 0.0
    %1498 = vmatprep.subr.mxu0 0.0
    %1499 = vmatpush1.msra.mxu0 0.0
    %1500 = vmatprep.subr.mxu0 0.0
    %1501 = vmatpush1.msra.mxu0 0.0
    %1502 = vmatprep.subr.mxu0 0.0
    %1503 = vmatpush1.msra.mxu0 0.0
    %1504 = vmatprep.subr.mxu0 0.0
    %1505 = vmatpush1.msra.mxu0 0.0
    %1506 = vmatprep.subr.mxu0 0.0
    %1507 = vmatpush1.msra.mxu0 0.0
    %1508 = vmatprep.subr.mxu0 0.0
    %1509 = vmatpush1.msra.mxu0 0.0
    %1510 = vmatprep.subr.mxu0 0.0
    %1511 = vmatpush1.msra.mxu0 0.0
    %1512 = vmatprep.subr.mxu0 0.0
    %1513 = vmatpush1.msra.mxu0 0.0
    %1514 = vmatprep.subr.mxu0 0.0
    %1515 = vmatpush1.msra.mxu0 0.0
    %1516 = vmatprep.subr.mxu0 0.0
    %1517 = vmatpush1.msra.mxu0 0.0
    %1518 = vmatprep.subr.mxu0 0.0
    %1519 = vmatpush1.msra.mxu0 0.0
    %1520 = vmatprep.subr.mxu0 0.0
    %1521 = vmatpush1.msra.mxu0 0.0
    %1522 = vmatprep.mubr.f32.mxu0 0.0
    %1523 = vmatmul.mubr.f32.gmra.mrb[0].mxu0 %v1377
    %v1524 = vpop.f32.mrb[0].mxu0
    %v1525 = vadd.f32 0.0, %v1524
    %v1526 = vpop.f32.mrb[0].mxu0
    %v1527 = vadd.f32 0.0, %v1526
    %1528 = vdwg.mxu0
    %v1529 = vadd.f32 %v1383, %v1454
    %v1530 = vadd.f32 %v1384, %v1456
    %v1531 = vadd.f32 %v1385, %v1525
    %v1532 = vadd.f32 %v1386, %v1527
    %v1533 = vxor.u32 %v1529, 2147483648
    %v1534 = vmul.f32 %v1533, 1.442695
    %v1535 = vpow.pop %v1534
    %v1536 = vadd.f32 %v1535, 1.0
    %v1537 = vrcp.pop %v1536
    %v1538 = vmul.f32 1.0, %v1537
    %v1539 = vxor.u32 %v1530, 2147483648
    %v1540 = vmul.f32 %v1539, 1.442695
    %v1541 = vpow.pop %v1540
    %v1542 = vadd.f32 %v1541, 1.0
    %v1543 = vrcp.pop %v1542
    %v1544 = vmul.f32 1.0, %v1543
    %v1545 = vtanh.pop %v1531
    %v1546 = vxor.u32 %v1532, 2147483648
    %v1547 = vmul.f32 %v1546, 1.442695
    %v1548 = vpow.pop %v1547
    %v1549 = vadd.f32 %v1548, 1.0
    %v1550 = vrcp.pop %v1549
    %v1551 = vmul.f32 1.0, %v1550
    %v1552 = vmul.f32 %v1544, %v1375
    %v1553 = vmul.f32 %v1538, %v1545
    %v1554 = vadd.f32 %v1552, %v1553
    %v1555 = vtanh.pop %v1554
    %v1556 = vmul.f32 %v1551, %v1555
    %s1557 = scalar_lea.vmem [#allocation11], 40
    %1558 = vst [vmem:[%s1557] sm:$0xff] %v1556
    %s1559 = smul.u32 6, 4
    %s1560 = smul.addr %s1559, 8
    %s1561 = scalar_lea.vmem [#allocation2], %s1560
    %v1562 = vld [vmem:[%s1561] sm:$0xff]
    %v1563 = vld [vmem:[%s1561 + $0x8] sm:$0xff]
    %v1564 = vld [vmem:[%s1561 + $0x10] sm:$0xff]
    %v1565 = vld [vmem:[%s1561 + $0x18] sm:$0xff]
    %1566 = vmatprep.subr.mxu0 %v421
    %1567 = vmatpush1.msra.mxu0 %v420
    %1568 = vmatprep.subr.mxu0 %v425
    %1569 = vmatpush1.msra.mxu0 %v424
    %1570 = vmatprep.subr.mxu0 %v429
    %1571 = vmatpush1.msra.mxu0 %v428
    %1572 = vmatprep.subr.mxu0 %v433
    %1573 = vmatpush1.msra.mxu0 %v432
    %1574 = vmatprep.subr.mxu0 %v437
    %1575 = vmatpush1.msra.mxu0 %v436
    %1576 = vmatprep.subr.mxu0 %v441
    %1577 = vmatpush1.msra.mxu0 %v440
    %1578 = vmatprep.subr.mxu0 %v445
    %1579 = vmatpush1.msra.mxu0 %v444
    %1580 = vmatprep.subr.mxu0 %v449
    %1581 = vmatpush1.msra.mxu0 %v448
    %1582 = vmatprep.subr.mxu0 %v453
    %1583 = vmatpush1.msra.mxu0 %v452
    %1584 = vmatprep.subr.mxu0 %v457
    %1585 = vmatpush1.msra.mxu0 %v456
    %1586 = vmatprep.subr.mxu0 %v461
    %1587 = vmatpush1.msra.mxu0 %v460
    %1588 = vmatprep.subr.mxu0 %v465
    %1589 = vmatpush1.msra.mxu0 %v464
    %1590 = vmatprep.subr.mxu0 %v469
    %1591 = vmatpush1.msra.mxu0 %v468
    %1592 = vmatprep.subr.mxu0 %v473
    %1593 = vmatpush1.msra.mxu0 %v472
    %1594 = vmatprep.subr.mxu0 %v477
    %1595 = vmatpush1.msra.mxu0 %v476
    %1596 = vmatprep.subr.mxu0 %v481
    %1597 = vmatpush1.msra.mxu0 %v480
    %1598 = vmatprep.subr.mxu0 0.0
    %1599 = vmatpush1.msra.mxu0 0.0
    %1600 = vmatprep.subr.mxu0 0.0
    %1601 = vmatpush1.msra.mxu0 0.0
    %1602 = vmatprep.subr.mxu0 0.0
    %1603 = vmatpush1.msra.mxu0 0.0
    %1604 = vmatprep.subr.mxu0 0.0
    %1605 = vmatpush1.msra.mxu0 0.0
    %1606 = vmatprep.subr.mxu0 0.0
    %1607 = vmatpush1.msra.mxu0 0.0
    %1608 = vmatprep.subr.mxu0 0.0
    %1609 = vmatpush1.msra.mxu0 0.0
    %1610 = vmatprep.subr.mxu0 0.0
    %1611 = vmatpush1.msra.mxu0 0.0
    %1612 = vmatprep.subr.mxu0 0.0
    %1613 = vmatpush1.msra.mxu0 0.0
    %1614 = vmatprep.subr.mxu0 0.0
    %1615 = vmatpush1.msra.mxu0 0.0
    %1616 = vmatprep.subr.mxu0 0.0
    %1617 = vmatpush1.msra.mxu0 0.0
    %1618 = vmatprep.subr.mxu0 0.0
    %1619 = vmatpush1.msra.mxu0 0.0
    %1620 = vmatprep.subr.mxu0 0.0
    %1621 = vmatpush1.msra.mxu0 0.0
    %1622 = vmatprep.subr.mxu0 0.0
    %1623 = vmatpush1.msra.mxu0 0.0
    %1624 = vmatprep.subr.mxu0 0.0
    %1625 = vmatpush1.msra.mxu0 0.0
    %1626 = vmatprep.subr.mxu0 0.0
    %1627 = vmatpush1.msra.mxu0 0.0
    %1628 = vmatprep.subr.mxu0 0.0
    %1629 = vmatpush1.msra.mxu0 0.0
    %1630 = vmatprep.mubr.f32.mxu0 0.0
    %1631 = vmatmul.mubr.f32.gmra.mrb[0].mxu0 %v1556
    %v1632 = vpop.f32.mrb[0].mxu0
    %v1633 = vadd.f32 0.0, %v1632
    %v1634 = vpop.f32.mrb[0].mxu0
    %v1635 = vadd.f32 0.0, %v1634
    %1636 = vdwg.mxu0
    %1637 = vmatprep.subr.mxu0 %v423
    %1638 = vmatpush1.msra.mxu0 %v422
    %1639 = vmatprep.subr.mxu0 %v427
    %1640 = vmatpush1.msra.mxu0 %v426
    %1641 = vmatprep.subr.mxu0 %v431
    %1642 = vmatpush1.msra.mxu0 %v430
    %1643 = vmatprep.subr.mxu0 %v435
    %1644 = vmatpush1.msra.mxu0 %v434
    %1645 = vmatprep.subr.mxu0 %v439
    %1646 = vmatpush1.msra.mxu0 %v438
    %1647 = vmatprep.subr.mxu0 %v443
    %1648 = vmatpush1.msra.mxu0 %v442
    %1649 = vmatprep.subr.mxu0 %v447
    %1650 = vmatpush1.msra.mxu0 %v446
    %1651 = vmatprep.subr.mxu0 %v451
    %1652 = vmatpush1.msra.mxu0 %v450
    %1653 = vmatprep.subr.mxu0 %v455
    %1654 = vmatpush1.msra.mxu0 %v454
    %1655 = vmatprep.subr.mxu0 %v459
    %1656 = vmatpush1.msra.mxu0 %v458
    %1657 = vmatprep.subr.mxu0 %v463
    %1658 = vmatpush1.msra.mxu0 %v462
    %1659 = vmatprep.subr.mxu0 %v467
    %1660 = vmatpush1.msra.mxu0 %v466
    %1661 = vmatprep.subr.mxu0 %v471
    %1662 = vmatpush1.msra.mxu0 %v470
    %1663 = vmatprep.subr.mxu0 %v475
    %1664 = vmatpush1.msra.mxu0 %v474
    %1665 = vmatprep.subr.mxu0 %v479
    %1666 = vmatpush1.msra.mxu0 %v478
    %1667 = vmatprep.subr.mxu0 %v483
    %1668 = vmatpush1.msra.mxu0 %v482
    %1669 = vmatprep.subr.mxu0 0.0
    %1670 = vmatpush1.msra.mxu0 0.0
    %1671 = vmatprep.subr.mxu0 0.0
    %1672 = vmatpush1.msra.mxu0 0.0
    %1673 = vmatprep.subr.mxu0 0.0
    %1674 = vmatpush1.msra.mxu0 0.0
    %1675 = vmatprep.subr.mxu0 0.0
    %1676 = vmatpush1.msra.mxu0 0.0
    %1677 = vmatprep.subr.mxu0 0.0
    %1678 = vmatpush1.msra.mxu0 0.0
    %1679 = vmatprep.subr.mxu0 0.0
    %1680 = vmatpush1.msra.mxu0 0.0
    %1681 = vmatprep.subr.mxu0 0.0
    %1682 = vmatpush1.msra.mxu0 0.0
    %1683 = vmatprep.subr.mxu0 0.0
    %1684 = vmatpush1.msra.mxu0 0.0
    %1685 = vmatprep.subr.mxu0 0.0
    %1686 = vmatpush1.msra.mxu0 0.0
    %1687 = vmatprep.subr.mxu0 0.0
    %1688 = vmatpush1.msra.mxu0 0.0
    %1689 = vmatprep.subr.mxu0 0.0
    %1690 = vmatpush1.msra.mxu0 0.0
    %1691 = vmatprep.subr.mxu0 0.0
    %1692 = vmatpush1.msra.mxu0 0.0
    %1693 = vmatprep.subr.mxu0 0.0
    %1694 = vmatpush1.msra.mxu0 0.0
    %1695 = vmatprep.subr.mxu0 0.0
    %1696 = vmatpush1.msra.mxu0 0.0
    %1697 = vmatprep.subr.mxu0 0.0
    %1698 = vmatpush1.msra.mxu0 0.0
    %1699 = vmatprep.subr.mxu0 0.0
    %1700 = vmatpush1.msra.mxu0 0.0
    %1701 = vmatprep.mubr.f32.mxu0 0.0
    %1702 = vmatmul.mubr.f32.gmra.mrb[0].mxu0 %v1556
    %v1703 = vpop.f32.mrb[0].mxu0
    %v1704 = vadd.f32 0.0, %v1703
    %v1705 = vpop.f32.mrb[0].mxu0
    %v1706 = vadd.f32 0.0, %v1705
    %1707 = vdwg.mxu0
    %v1708 = vadd.f32 %v1562, %v1633
    %v1709 = vadd.f32 %v1563, %v1635
    %v1710 = vadd.f32 %v1564, %v1704
    %v1711 = vadd.f32 %v1565, %v1706
    %v1712 = vxor.u32 %v1708, 2147483648
    %v1713 = vmul.f32 %v1712, 1.442695
    %v1714 = vpow.pop %v1713
    %v1715 = vadd.f32 %v1714, 1.0
    %v1716 = vrcp.pop %v1715
    %v1717 = vmul.f32 1.0, %v1716
    %v1718 = vxor.u32 %v1709, 2147483648
    %v1719 = vmul.f32 %v1718, 1.442695
    %v1720 = vpow.pop %v1719
    %v1721 = vadd.f32 %v1720, 1.0
    %v1722 = vrcp.pop %v1721
    %v1723 = vmul.f32 1.0, %v1722
    %v1724 = vtanh.pop %v1710
    %v1725 = vxor.u32 %v1711, 2147483648
    %v1726 = vmul.f32 %v1725, 1.442695
    %v1727 = vpow.pop %v1726
    %v1728 = vadd.f32 %v1727, 1.0
    %v1729 = vrcp.pop %v1728
    %v1730 = vmul.f32 1.0, %v1729
    %v1731 = vmul.f32 %v1723, %v1554
    %v1732 = vmul.f32 %v1717, %v1724
    %v1733 = vadd.f32 %v1731, %v1732
    %v1734 = vtanh.pop %v1733
    %v1735 = vmul.f32 %v1730, %v1734
    %s1736 = scalar_lea.vmem [#allocation11], 48
    %1737 = vst [vmem:[%s1736] sm:$0xff] %v1735
    %s1738 = smul.u32 7, 4
    %s1739 = smul.addr %s1738, 8
    %s1740 = scalar_lea.vmem [#allocation2], %s1739
    %v1741 = vld [vmem:[%s1740] sm:$0xff]
    %v1742 = vld [vmem:[%s1740 + $0x8] sm:$0xff]
    %v1743 = vld [vmem:[%s1740 + $0x10] sm:$0xff]
    %v1744 = vld [vmem:[%s1740 + $0x18] sm:$0xff]
    %1745 = vmatprep.subr.mxu0 %v421
    %1746 = vmatpush1.msra.mxu0 %v420
    %1747 = vmatprep.subr.mxu0 %v425
    %1748 = vmatpush1.msra.mxu0 %v424
    %1749 = vmatprep.subr.mxu0 %v429
    %1750 = vmatpush1.msra.mxu0 %v428
    %1751 = vmatprep.subr.mxu0 %v433
    %1752 = vmatpush1.msra.mxu0 %v432
    %1753 = vmatprep.subr.mxu0 %v437
    %1754 = vmatpush1.msra.mxu0 %v436
    %1755 = vmatprep.subr.mxu0 %v441
    %1756 = vmatpush1.msra.mxu0 %v440
    %1757 = vmatprep.subr.mxu0 %v445
    %1758 = vmatpush1.msra.mxu0 %v444
    %1759 = vmatprep.subr.mxu0 %v449
    %1760 = vmatpush1.msra.mxu0 %v448
    %1761 = vmatprep.subr.mxu0 %v453
    %1762 = vmatpush1.msra.mxu0 %v452
    %1763 = vmatprep.subr.mxu0 %v457
    %1764 = vmatpush1.msra.mxu0 %v456
    %1765 = vmatprep.subr.mxu0 %v461
    %1766 = vmatpush1.msra.mxu0 %v460
    %1767 = vmatprep.subr.mxu0 %v465
    %1768 = vmatpush1.msra.mxu0 %v464
    %1769 = vmatprep.subr.mxu0 %v469
    %1770 = vmatpush1.msra.mxu0 %v468
    %1771 = vmatprep.subr.mxu0 %v473
    %1772 = vmatpush1.msra.mxu0 %v472
    %1773 = vmatprep.subr.mxu0 %v477
    %1774 = vmatpush1.msra.mxu0 %v476
    %1775 = vmatprep.subr.mxu0 %v481
    %1776 = vmatpush1.msra.mxu0 %v480
    %1777 = vmatprep.subr.mxu0 0.0
    %1778 = vmatpush1.msra.mxu0 0.0
    %1779 = vmatprep.subr.mxu0 0.0
    %1780 = vmatpush1.msra.mxu0 0.0
    %1781 = vmatprep.subr.mxu0 0.0
    %1782 = vmatpush1.msra.mxu0 0.0
    %1783 = vmatprep.subr.mxu0 0.0
    %1784 = vmatpush1.msra.mxu0 0.0
    %1785 = vmatprep.subr.mxu0 0.0
    %1786 = vmatpush1.msra.mxu0 0.0
    %1787 = vmatprep.subr.mxu0 0.0
    %1788 = vmatpush1.msra.mxu0 0.0
    %1789 = vmatprep.subr.mxu0 0.0
    %1790 = vmatpush1.msra.mxu0 0.0
    %1791 = vmatprep.subr.mxu0 0.0
    %1792 = vmatpush1.msra.mxu0 0.0
    %1793 = vmatprep.subr.mxu0 0.0
    %1794 = vmatpush1.msra.mxu0 0.0
    %1795 = vmatprep.subr.mxu0 0.0
    %1796 = vmatpush1.msra.mxu0 0.0
    %1797 = vmatprep.subr.mxu0 0.0
    %1798 = vmatpush1.msra.mxu0 0.0
    %1799 = vmatprep.subr.mxu0 0.0
    %1800 = vmatpush1.msra.mxu0 0.0
    %1801 = vmatprep.subr.mxu0 0.0
    %1802 = vmatpush1.msra.mxu0 0.0
    %1803 = vmatprep.subr.mxu0 0.0
    %1804 = vmatpush1.msra.mxu0 0.0
    %1805 = vmatprep.subr.mxu0 0.0
    %1806 = vmatpush1.msra.mxu0 0.0
    %1807 = vmatprep.subr.mxu0 0.0
    %1808 = vmatpush1.msra.mxu0 0.0
    %1809 = vmatprep.mubr.f32.mxu0 0.0
    %1810 = vmatmul.mubr.f32.gmra.mrb[0].mxu0 %v1735
    %v1811 = vpop.f32.mrb[0].mxu0
    %v1812 = vadd.f32 0.0, %v1811
    %v1813 = vpop.f32.mrb[0].mxu0
    %v1814 = vadd.f32 0.0, %v1813
    %1815 = vdwg.mxu0
    %1816 = vmatprep.subr.mxu0 %v423
    %1817 = vmatpush1.msra.mxu0 %v422
    %1818 = vmatprep.subr.mxu0 %v427
    %1819 = vmatpush1.msra.mxu0 %v426
    %1820 = vmatprep.subr.mxu0 %v431
    %1821 = vmatpush1.msra.mxu0 %v430
    %1822 = vmatprep.subr.mxu0 %v435
    %1823 = vmatpush1.msra.mxu0 %v434
    %1824 = vmatprep.subr.mxu0 %v439
    %1825 = vmatpush1.msra.mxu0 %v438
    %1826 = vmatprep.subr.mxu0 %v443
    %1827 = vmatpush1.msra.mxu0 %v442
    %1828 = vmatprep.subr.mxu0 %v447
    %1829 = vmatpush1.msra.mxu0 %v446
    %1830 = vmatprep.subr.mxu0 %v451
    %1831 = vmatpush1.msra.mxu0 %v450
    %1832 = vmatprep.subr.mxu0 %v455
    %1833 = vmatpush1.msra.mxu0 %v454
    %1834 = vmatprep.subr.mxu0 %v459
    %1835 = vmatpush1.msra.mxu0 %v458
    %1836 = vmatprep.subr.mxu0 %v463
    %1837 = vmatpush1.msra.mxu0 %v462
    %1838 = vmatprep.subr.mxu0 %v467
    %1839 = vmatpush1.msra.mxu0 %v466
    %1840 = vmatprep.subr.mxu0 %v471
    %1841 = vmatpush1.msra.mxu0 %v470
    %1842 = vmatprep.subr.mxu0 %v475
    %1843 = vmatpush1.msra.mxu0 %v474
    %1844 = vmatprep.subr.mxu0 %v479
    %1845 = vmatpush1.msra.mxu0 %v478
    %1846 = vmatprep.subr.mxu0 %v483
    %1847 = vmatpush1.msra.mxu0 %v482
    %1848 = vmatprep.subr.mxu0 0.0
    %1849 = vmatpush1.msra.mxu0 0.0
    %1850 = vmatprep.subr.mxu0 0.0
    %1851 = vmatpush1.msra.mxu0 0.0
    %1852 = vmatprep.subr.mxu0 0.0
    %1853 = vmatpush1.msra.mxu0 0.0
    %1854 = vmatprep.subr.mxu0 0.0
    %1855 = vmatpush1.msra.mxu0 0.0
    %1856 = vmatprep.subr.mxu0 0.0
    %1857 = vmatpush1.msra.mxu0 0.0
    %1858 = vmatprep.subr.mxu0 0.0
    %1859 = vmatpush1.msra.mxu0 0.0
    %1860 = vmatprep.subr.mxu0 0.0
    %1861 = vmatpush1.msra.mxu0 0.0
    %1862 = vmatprep.subr.mxu0 0.0
    %1863 = vmatpush1.msra.mxu0 0.0
    %1864 = vmatprep.subr.mxu0 0.0
    %1865 = vmatpush1.msra.mxu0 0.0
    %1866 = vmatprep.subr.mxu0 0.0
    %1867 = vmatpush1.msra.mxu0 0.0
    %1868 = vmatprep.subr.mxu0 0.0
    %1869 = vmatpush1.msra.mxu0 0.0
    %1870 = vmatprep.subr.mxu0 0.0
    %1871 = vmatpush1.msra.mxu0 0.0
    %1872 = vmatprep.subr.mxu0 0.0
    %1873 = vmatpush1.msra.mxu0 0.0
    %1874 = vmatprep.subr.mxu0 0.0
    %1875 = vmatpush1.msra.mxu0 0.0
    %1876 = vmatprep.subr.mxu0 0.0
    %1877 = vmatpush1.msra.mxu0 0.0
    %1878 = vmatprep.subr.mxu0 0.0
    %1879 = vmatpush1.msra.mxu0 0.0
    %1880 = vmatprep.mubr.f32.mxu0 0.0
    %1881 = vmatmul.mubr.f32.gmra.mrb[0].mxu0 %v1735
    %v1882 = vpop.f32.mrb[0].mxu0
    %v1883 = vadd.f32 0.0, %v1882
    %v1884 = vpop.f32.mrb[0].mxu0
    %v1885 = vadd.f32 0.0, %v1884
    %1886 = vdwg.mxu0
    %v1887 = vadd.f32 %v1741, %v1812
    %v1888 = vadd.f32 %v1742, %v1814
    %v1889 = vadd.f32 %v1743, %v1883
    %v1890 = vadd.f32 %v1744, %v1885
    %v1891 = vxor.u32 %v1887, 2147483648
    %v1892 = vmul.f32 %v1891, 1.442695
    %v1893 = vpow.pop %v1892
    %v1894 = vadd.f32 %v1893, 1.0
    %v1895 = vrcp.pop %v1894
    %v1896 = vmul.f32 1.0, %v1895
    %v1897 = vxor.u32 %v1888, 2147483648
    %v1898 = vmul.f32 %v1897, 1.442695
    %v1899 = vpow.pop %v1898
    %v1900 = vadd.f32 %v1899, 1.0
    %v1901 = vrcp.pop %v1900
    %v1902 = vmul.f32 1.0, %v1901
    %v1903 = vtanh.pop %v1889
    %v1904 = vxor.u32 %v1890, 2147483648
    %v1905 = vmul.f32 %v1904, 1.442695
    %v1906 = vpow.pop %v1905
    %v1907 = vadd.f32 %v1906, 1.0
    %v1908 = vrcp.pop %v1907
    %v1909 = vmul.f32 1.0, %v1908
    %v1910 = vmul.f32 %v1902, %v1733
    %v1911 = vmul.f32 %v1896, %v1903
    %v1912 = vadd.f32 %v1910, %v1911
    %v1913 = vtanh.pop %v1912
    %v1914 = vmul.f32 %v1909, %v1913
    %s1915 = scalar_lea.vmem [#allocation11], 56
    %1916 = vst [vmem:[%s1915] sm:$0xff] %v1914
    %1917 = vst [vmem:[#allocation3] sm:$0xff] %v1914
    %1918 = vst [vmem:[#allocation4] sm:$0xff] %v1912
    // Predicated region
    $region34: #{tpu_custom_call.1} parent=1 // pred_check
      %p1919 = pneg %p62
    $region35: #{tpu_custom_call.1} parent=1 // pred_check_branch
      %1921 = sbr.rel (%p1919) target = $region37
    $region36: #{tpu_custom_call.1} parent=1 // pred_region
      %v1922 = vld [vmem:[#allocation4] sm:$0xff]
      %1923 = vst [vmem:[#allocation12] sm:$0xff] %v1922
    $region37: #{tpu_custom_call.1} parent=1 // pred_fallthru
      _
    // Predicated region
    $region38: #{tpu_custom_call.1} parent=1 // pred_check
      _
    $region39: #{tpu_custom_call.1} parent=1 // pred_check_branch
      %1925 = sbr.rel (0) target = $region41
    $region40: #{tpu_custom_call.1} parent=1 // pred_region
      %s1927 = ssub.s32 1024, 1024
      %1928 = vsyncadd [#allocation7], %s1927
      %s1929 = sshll.u32 [#allocation11], 4
      %s1930 = int_to_ptr.vmem [resolvable:$true] %s1929
      %1935 = dma.vmem_to_hbm [thread:$0]  %s1930, 1024, %s4, [#allocation7], 128, 128, 8
    $region41: #{tpu_custom_call.1} parent=1 // pred_fallthru
      _
    // Predicated region
    $region42: #{tpu_custom_call.1} parent=1 // pred_check
      _
    $region43: #{tpu_custom_call.1} parent=1 // pred_check_branch
      %1937 = sbr.rel (0) target = $region45
    $region44: #{tpu_custom_call.1} parent=1 // pred_region
      %s1939 = ssub.s32 128, 128
      %1940 = vsyncadd [#allocation13], %s1939
      %s1942 = sshll.u32 [#allocation12], 4
      %s1943 = int_to_ptr.vmem [resolvable:$true] %s1942
      %1945 = dma.vmem_to_hbm [thread:$0]  %s1943, 128, %s5, [#allocation13]
    $region45: #{tpu_custom_call.1} parent=1 // pred_fallthru
      _
    // Predicated region
    $region46: #{tpu_custom_call.1} parent=1 // pred_check
      _
    $region47: #{tpu_custom_call.1} parent=1 // pred_check_branch
      %1947 = sbr.rel (0) target = $region49
    $region48: #{tpu_custom_call.1} parent=1 // pred_region
      %1948 = dma.done [#allocation7], 1024
    $region49: #{tpu_custom_call.1} parent=1 // pred_fallthru
      _
    // Predicated region
    $region50: #{tpu_custom_call.1} parent=1 // pred_check
      _
    $region51: #{tpu_custom_call.1} parent=1 // pred_check_branch
      %1950 = sbr.rel (0) target = $region53
    $region52: #{tpu_custom_call.1} parent=1 // pred_region
      %1951 = dma.done [#allocation13], 128
    $region53: #{tpu_custom_call.1} parent=1 // pred_fallthru
      _
    %1952 = vsyncpa [#allocation6], 1
    %1953 = vsyncpa [#allocation9], 1
    %1954 = vsyncpa [#allocation7], 1
    %1955 = vsyncpa [#allocation13], 1

</llo_original>
